<compile_context>
chip_gen: v7x
topology: tpu7x:2x2x1
jax: 0.10.0
libtpu: 0.0.40
codegen_flags: <defaults>
</compile_context>

<pallas_src>
import functools

import jax
import jax.numpy as jnp
from jax import lax
from jax.experimental import pallas as pl
from jax.experimental.pallas import tpu as pltpu

TEMPERATURE = 0.01
_NEG = -1e30  # finite "minus infinity": avoids inf-inf -> nan in online updates


def _clip_lse_kernel(txt_ref, img_ref, row_lse_ref, colmax_ref, colsum_ref,
                     row_m, row_s, *, n_true, bm, bn, padded):
    i = pl.program_id(0)          # row tile (text)   -- "parallel"
    j = pl.program_id(1)          # col tile (image)  -- "arbitrary" (row reduction)
    nj = pl.num_programs(1)

    @pl.when(j == 0)
    def _init_row():
        row_m[...] = jnp.full_like(row_m, _NEG)
        row_s[...] = jnp.zeros_like(row_s)

    # sim tile on the MXU; the text operand already carries 1/temperature.
    sim = lax.dot_general(
        txt_ref[...], img_ref[...],
        dimension_numbers=(((1,), (1,)), ((), ())),
        preferred_element_type=jnp.float32,
    )

    if padded:  # static (trace-time) flag; cheap 1-D iotas broadcast in the compare
        rid = i * bm + lax.broadcasted_iota(jnp.int32, (bm, 1), 0)
        cid = j * bn + lax.broadcasted_iota(jnp.int32, (1, bn), 1)
        sim = jnp.where((rid < n_true) & (cid < n_true), sim, _NEG)

    # ---- single exp pass per tile (per-tile scalar shift) ----
    shift = jnp.max(sim, axis=1, keepdims=True)      # (bm, 1)  lane reduce
    shift = jnp.max(shift, axis=0, keepdims=True)    # (1, 1)   sublane reduce
    p = jnp.exp(sim - shift)
    row_part = jnp.sum(p, axis=1, keepdims=True)     # (bm, 1)
    # NOTE: if the axis-0 (XLU) reduction ever saturates, this can be computed
    # as ones((1,bm)) @ p on the MXU instead.
    col_part = jnp.sum(p, axis=0, keepdims=True)     # (1, bn)

    # ---- online row LSE merge (shift is the candidate max) ----
    new_m = jnp.maximum(row_m[...], shift)
    row_s[...] = (row_s[...] * jnp.exp(row_m[...] - new_m)
                  + row_part * jnp.exp(shift - new_m))
    row_m[...] = new_m

    # ---- per-(i,j) column partials; merged across row tiles in XLA ----
    colmax_ref[j, 0] = jnp.broadcast_to(shift, (1, bn))
    colsum_ref[j, 0] = col_part

    @pl.when(j == nj - 1)
    def _emit_rows():
        row_lse_ref[...] = jnp.log(row_s[...]) + row_m[...]


def _round_up(x, m):
    return ((x + m - 1) // m) * m


def _default_tiles():
    """Per-generation (bm, bn) defaults from the roofline analysis."""
    try:
        kind = jax.devices()[0].device_kind.lower()
    except Exception:  # pragma: no cover
        kind = ""
    if "v6" in kind:           # v6e: 918 TF/s vs ~1.3 TB/s -> tall text tile
        return 1024, 256
    # v7x (64 MiB VMEM, 2 TCs, ~3.2 TB/s/TC), v5e (16 MiB scoped default) and
    # unknown chips: conservative tiles that are compute-bound on both.
    return 512, 256


def clip_loss(image_features, text_features, *, temperature=TEMPERATURE,
              bm=None, bn=None, compute_dtype=jnp.bfloat16):
    """image_features, text_features: [N, D]. Returns the scalar CLIP loss.

    compute_dtype=jnp.bfloat16 (default) halves streamed HBM bytes and uses the
    native bf16 MXU; all softmax/log math stays in f32 inside the kernel.
    """
    assert image_features.shape == text_features.shape
    n, d = image_features.shape
    itemsize = jnp.dtype(compute_dtype).itemsize

    dbm, dbn = _default_tiles()
    bm = dbm if bm is None else bm
    bn = dbn if bn is None else bn
    assert bm % 128 == 0 and bn % 128 == 0, "tiles must be multiples of 128"

    # Clamp tiles to the problem size and force bm to be a multiple of bn so a
    # single padded N works for both grid axes.
    bn = min(bn, _round_up(n, 128))
    bm = min(bm, _round_up(n, bn))
    bm = max(bn, (bm // bn) * bn)

    # Keep double-buffered input tiles + f32 tile temporaries inside the v5e
    # 16 MiB scoped-VMEM default (raise vmem_limit_bytes instead if desired).
    budget = 12 * 1024 * 1024

    def _vmem_est(bm_):
        return (2 * bm_ * d * itemsize + 2 * bn * d * itemsize
                + 2 * bm_ * bn * 4 + 4 * bm_ * 4)

    while bm > bn and _vmem_est(bm) > budget:
        bm = max(bn, (bm // 2 // bn) * bn)

    n_pad = _round_up(n, bm)          # bm % bn == 0  =>  divisible by both
    padded = n_pad != n
    nt_i = n_pad // bm
    nt_j = n_pad // bn

    # Fold 1/temperature into the text operand once (reused by every col tile).
    txt_c = (text_features.astype(jnp.float32) * (1.0 / temperature)).astype(compute_dtype)
    img_c = image_features.astype(compute_dtype)

    # Diagonal term (sum_i sim[i,i]) in f32, from the SAME cast operands the
    # MXU sees (bf16 products are exact in f32, so this matches the kernel's
    # sim diagonal and the bf16 rounding cancels in LSE - diag). O(N*D).
    diag_sum = jnp.sum(txt_c.astype(jnp.float32) * img_c.astype(jnp.float32))

    if padded:
        txt_p = jnp.pad(txt_c, ((0, n_pad - n), (0, 0)))
        img_p = jnp.pad(img_c, ((0, n_pad - n), (0, 0)))
    else:
        txt_p, img_p = txt_c, img_c

    kernel = functools.partial(_clip_lse_kernel,
                               n_true=n, bm=bm, bn=bn, padded=padded)

    cost = pl.CostEstimate(
        flops=int(2 * n_pad * n_pad * d),
        transcendentals=int(n_pad * n_pad),
        bytes_accessed=int((nt_i + 1) * n_pad * d * itemsize
                           + (2 * nt_i + 1) * n_pad * 4),
    )

    row_lse, col_max, col_sum = pl.pallas_call(
        kernel,
        out_shape=(
            jax.ShapeDtypeStruct((n_pad, 1), jnp.float32),            # per-row LSE
            jax.ShapeDtypeStruct((nt_j, nt_i, 1, bn), jnp.float32),   # col partial max
            jax.ShapeDtypeStruct((nt_j, nt_i, 1, bn), jnp.float32),   # col partial sum
        ),
        grid_spec=pltpu.PrefetchScalarGridSpec(
            num_scalar_prefetch=0,
            grid=(nt_i, nt_j),
            in_specs=[
                # text/row tile: resident for the whole j sweep.
                pl.BlockSpec((bm, d), lambda i, j: (i, 0)),
                # image/col tile: re-streamed once per row sweep.
                # (pipeline_mode=pl.Buffered(3) is an option if DMA is exposed.)
                pl.BlockSpec((bn, d), lambda i, j: (j, 0)),
            ],
            out_specs=[
                pl.BlockSpec((bm, 1), lambda i, j: (i, 0)),
                pl.BlockSpec((nt_j, 1, 1, bn), lambda i, j: (0, i, 0, 0)),
                pl.BlockSpec((nt_j, 1, 1, bn), lambda i, j: (0, i, 0, 0)),
            ],
            scratch_shapes=[
                pltpu.VMEM((bm, 1), jnp.float32),   # row running max
                pltpu.VMEM((bm, 1), jnp.float32),   # row running sum
            ],
        ),
        compiler_params=pltpu.CompilerParams(
            # No state crosses row tiles -> axis 0 can shard across the two
            # v7x TensorCores; axis 1 carries the row accumulators.
            dimension_semantics=("parallel", "arbitrary"),
        ),
        cost_estimate=cost,
    )(txt_p, img_p)

    # ---- tiny O(nt_i * N) merges in plain XLA ----
    row_sum = jnp.sum(row_lse[:n, 0])

    cmax = col_max[:, :, 0, :]                                 # (nt_j, nt_i, bn)
    csum = col_sum[:, :, 0, :]
    m = jnp.max(cmax, axis=1)                                  # (nt_j, bn)
    s = jnp.sum(csum * jnp.exp(cmax - m[:, None, :]), axis=1)  # (nt_j, bn)
    col_lse = (jnp.log(s) + m).reshape(-1)[:n]                 # padded cols sliced off
    col_sum_total = jnp.sum(col_lse)

    return (row_sum + col_sum_total - 2.0 * diag_sum) / (2.0 * n)


def clip_loss_ref(image_features, text_features, temperature=TEMPERATURE):
    """Pure-JAX reference mirroring the PyTorch forward."""
    sim = jnp.einsum("id,jd->ij", text_features, image_features) / temperature
    diag = jnp.diagonal(sim)
    lse_rows = jax.scipy.special.logsumexp(sim, axis=1)
    lse_cols = jax.scipy.special.logsumexp(sim, axis=0)
    return 0.5 * (jnp.mean(lse_rows - diag) + jnp.mean(lse_cols - diag))


if __name__ == "__main__":
    key = jax.random.PRNGKey(0)

    def make_feats(k, n, d):
        k_img, k_txt = jax.random.split(k)
        img = jax.random.normal(k_img, (n, d), dtype=jnp.float32)
        txt = jax.random.normal(k_txt, (n, d), dtype=jnp.float32)
        # CLIP features are L2-normalized before the loss.
        img = img / jnp.linalg.norm(img, axis=-1, keepdims=True)
        txt = txt / jnp.linalg.norm(txt, axis=-1, keepdims=True)
        return img, txt

    k1, k2, k3 = jax.random.split(key, 3)

    # 1) Default path (bf16 operands, temperature=0.01); tiles clamp to 1x1 grid.
    img1, txt1 = make_feats(k1, 256, 64)
    out1 = jax.block_until_ready(clip_loss(img1, txt1))
    ref1 = clip_loss_ref(img1, txt1)
    assert jnp.allclose(out1, ref1, rtol=2e-3, atol=2e-3), (out1, ref1)

    # 2) Ragged batch -> padding/masking path (bf16 default).
    img2, txt2 = make_feats(k2, 200, 48)
    out2 = jax.block_until_ready(clip_loss(img2, txt2))
    ref2 = clip_loss_ref(img2, txt2)
    assert jnp.allclose(out2, ref2, rtol=2e-3, atol=2e-3), (out2, ref2)

    # 3) Multi-tile 3x3 grid + non-degenerate loss values: f32 operands and a
    #    larger temperature validate the online-LSE / column-merge math.
    img3, txt3 = make_feats(k3, 384, 64)
    out3 = jax.block_until_ready(
        clip_loss(img3, txt3, temperature=0.5, bm=128, bn=128,
                  compute_dtype=jnp.float32))
    ref3 = clip_loss_ref(img3, txt3, temperature=0.5)
    assert jnp.allclose(out3, ref3, rtol=2e-2, atol=2e-2), (out3, ref3)

    # 4) Padding + multi-tile (2x2 grid) together on the bf16 default path.
    out4 = jax.block_until_ready(clip_loss(img2, txt2, bm=128, bn=128))
    assert jnp.allclose(out4, ref2, rtol=2e-3, atol=2e-3), (out4, ref2)

    print("KERNEL_OK")
</pallas_src>

<mosaic_0001>
module attributes {stable_mosaic.version = 11 : i64} {
  func.func @_clip_lse_kernel(%arg0: i32, %arg1: i32, %arg2: memref<256x64xbf16, #tpu.memory_space<vmem>>, %arg3: memref<256x64xbf16, #tpu.memory_space<vmem>>, %arg4: memref<256x1xf32, #tpu.memory_space<vmem>>, %arg5: memref<1x1x1x256xf32, #tpu.memory_space<vmem>>, %arg6: memref<1x1x1x256xf32, #tpu.memory_space<vmem>>, %arg7: memref<256x1xf32, #tpu.memory_space<vmem>>, %arg8: memref<256x1xf32, #tpu.memory_space<vmem>>) attributes {dimension_semantics = [#tpu.dimension_semantics<parallel>, #tpu.dimension_semantics<arbitrary>], iteration_bounds = array<i64: 1, 1>, scalar_prefetch = 0 : i64, scratch_operands = 2 : i64, tpu.core_type = #tpu.core_type<tc>, window_params = [{transform_indices = @transform_0, window_bounds = array<i64: 256, 64>}, {transform_indices = @transform_1, window_bounds = array<i64: 256, 64>}, {transform_indices = @transform_2, window_bounds = array<i64: 256, 1>}, {transform_indices = @transform_3, window_bounds = array<i64: 1, 1, 1, 256>}, {transform_indices = @transform_4, window_bounds = array<i64: 1, 1, 1, 256>}]} {
    %c0_i32 = arith.constant 0 : i32
    %0 = arith.cmpi eq, %arg1, %c0_i32 : i32
    %1 = arith.extui %0 : i1 to i32
    %c0_i32_0 = arith.constant 0 : i32
    %2 = arith.cmpi ne, %1, %c0_i32_0 : i32
    scf.if %2 {
      %cst_26 = arith.constant -1.000000e+30 : f32
      %45 = vector.broadcast %cst_26 : f32 to vector<256x1xf32>
      %c0_27 = arith.constant 0 : index
      %c0_28 = arith.constant 0 : index
      %46 = vector.load %arg7[%c0_27, %c0_28] : memref<256x1xf32, #tpu.memory_space<vmem>>, vector<256x1xf32>
      tpu.vector_store %arg7[%c0_27, %c0_28], %45 {strides = array<i32>} : memref<256x1xf32, #tpu.memory_space<vmem>>, vector<256x1xf32>,
      %cst_29 = arith.constant 0.000000e+00 : f32
      %47 = vector.broadcast %cst_29 : f32 to vector<256x1xf32>
      %c0_30 = arith.constant 0 : index
      %c0_31 = arith.constant 0 : index
      %48 = vector.load %arg8[%c0_30, %c0_31] : memref<256x1xf32, #tpu.memory_space<vmem>>, vector<256x1xf32>
      tpu.vector_store %arg8[%c0_30, %c0_31], %47 {strides = array<i32>} : memref<256x1xf32, #tpu.memory_space<vmem>>, vector<256x1xf32>,
    } else {
    }
    %c0 = arith.constant 0 : index
    %c0_1 = arith.constant 0 : index
    %3 = vector.load %arg2[%c0, %c0_1] : memref<256x64xbf16, #tpu.memory_space<vmem>>, vector<256x64xbf16>
    %c0_2 = arith.constant 0 : index
    %c0_3 = arith.constant 0 : index
    %4 = vector.load %arg3[%c0_2, %c0_3] : memref<256x64xbf16, #tpu.memory_space<vmem>>, vector<256x64xbf16>
    %cst = arith.constant dense<0.000000e+00> : vector<256x256xf32>
    %5 = tpu.matmul %3, %4, %cst {dimension_numbers = #tpu.dot_dimension_numbers<[1], [1], [0], [0], [0, 0, 1, 0], [], []>} : vector<256x64xbf16>, vector<256x64xbf16>, vector<256x256xf32> -> vector<256x256xf32>
    %cst_4 = arith.constant dense<0xFF800000> : vector<256xf32>
    %6 = vector.multi_reduction <maximumf>, %5, %cst_4 [1] : vector<256x256xf32> to vector<256xf32>
    %7 = vector.shape_cast %6 : vector<256xf32> to vector<256x1xf32>
    %cst_5 = arith.constant dense<0xFF800000> : vector<1xf32>
    %8 = vector.multi_reduction <maximumf>, %7, %cst_5 [0] : vector<256x1xf32> to vector<1xf32>
    %9 = vector.shape_cast %8 : vector<1xf32> to vector<1x1xf32>
    %10 = vector.broadcast %9 : vector<1x1xf32> to vector<256x256xf32>
    %11 = arith.subf %5, %10 : vector<256x256xf32>
    %12 = math.exp %11 : vector<256x256xf32>
    %cst_6 = arith.constant dense<0.000000e+00> : vector<256xf32>
    %13 = vector.multi_reduction <add>, %12, %cst_6 [1] : vector<256x256xf32> to vector<256xf32>
    %14 = vector.shape_cast %13 : vector<256xf32> to vector<256x1xf32>
    %cst_7 = arith.constant dense<0.000000e+00> : vector<256xf32>
    %15 = vector.multi_reduction <add>, %12, %cst_7 [0] : vector<256x256xf32> to vector<256xf32>
    %16 = vector.shape_cast %15 : vector<256xf32> to vector<1x256xf32>
    %c0_8 = arith.constant 0 : index
    %c0_9 = arith.constant 0 : index
    %17 = vector.load %arg7[%c0_8, %c0_9] : memref<256x1xf32, #tpu.memory_space<vmem>>, vector<256x1xf32>
    %18 = vector.broadcast %9 : vector<1x1xf32> to vector<256x1xf32>
    %19 = arith.maximumf %17, %18 : vector<256x1xf32>
    %c0_10 = arith.constant 0 : index
    %c0_11 = arith.constant 0 : index
    %20 = vector.load %arg8[%c0_10, %c0_11] : memref<256x1xf32, #tpu.memory_space<vmem>>, vector<256x1xf32>
    %c0_12 = arith.constant 0 : index
    %c0_13 = arith.constant 0 : index
    %21 = vector.load %arg7[%c0_12, %c0_13] : memref<256x1xf32, #tpu.memory_space<vmem>>, vector<256x1xf32>
    %22 = arith.subf %21, %19 : vector<256x1xf32>
    %23 = math.exp %22 : vector<256x1xf32>
    %24 = arith.mulf %20, %23 : vector<256x1xf32>
    %25 = vector.broadcast %9 : vector<1x1xf32> to vector<256x1xf32>
    %26 = arith.subf %25, %19 : vector<256x1xf32>
    %27 = math.exp %26 : vector<256x1xf32>
    %28 = arith.mulf %14, %27 : vector<256x1xf32>
    %29 = arith.addf %24, %28 : vector<256x1xf32>
    %c0_14 = arith.constant 0 : index
    %c0_15 = arith.constant 0 : index
    %30 = vector.load %arg8[%c0_14, %c0_15] : memref<256x1xf32, #tpu.memory_space<vmem>>, vector<256x1xf32>
    tpu.vector_store %arg8[%c0_14, %c0_15], %29 {strides = array<i32>} : memref<256x1xf32, #tpu.memory_space<vmem>>, vector<256x1xf32>,
    %c0_16 = arith.constant 0 : index
    %c0_17 = arith.constant 0 : index
    %31 = vector.load %arg7[%c0_16, %c0_17] : memref<256x1xf32, #tpu.memory_space<vmem>>, vector<256x1xf32>
    tpu.vector_store %arg7[%c0_16, %c0_17], %19 {strides = array<i32>} : memref<256x1xf32, #tpu.memory_space<vmem>>, vector<256x1xf32>,
    %32 = vector.shape_cast %9 : vector<1x1xf32> to vector<1x1xf32>
    %33 = vector.broadcast %32 : vector<1x1xf32> to vector<1x256xf32>
    %34 = arith.index_cast %arg1 : i32 to index
    %c0_18 = arith.constant 0 : index
    %c0_19 = arith.constant 0 : index
    %c0_20 = arith.constant 0 : index
    %35 = vector.load %arg5[%34, %c0_18, %c0_19, %c0_20] : memref<1x1x1x256xf32, #tpu.memory_space<vmem>>, vector<1x1x1x256xf32>
    %36 = vector.shape_cast %35 : vector<1x1x1x256xf32> to vector<1x256xf32>
    %37 = vector.shape_cast %33 : vector<1x256xf32> to vector<1x1x1x256xf32>
    tpu.vector_store %arg5[%34, %c0_18, %c0_19, %c0_20], %37 {strides = array<i32>} : memref<1x1x1x256xf32, #tpu.memory_space<vmem>>, vector<1x1x1x256xf32>,
    %38 = arith.index_cast %arg1 : i32 to index
    %c0_21 = arith.constant 0 : index
    %c0_22 = arith.constant 0 : index
    %c0_23 = arith.constant 0 : index
    %39 = vector.load %arg6[%38, %c0_21, %c0_22, %c0_23] : memref<1x1x1x256xf32, #tpu.memory_space<vmem>>, vector<1x1x1x256xf32>
    %40 = vector.shape_cast %39 : vector<1x1x1x256xf32> to vector<1x256xf32>
    %41 = vector.shape_cast %16 : vector<1x256xf32> to vector<1x1x1x256xf32>
    tpu.vector_store %arg6[%38, %c0_21, %c0_22, %c0_23], %41 {strides = array<i32>} : memref<1x1x1x256xf32, #tpu.memory_space<vmem>>, vector<1x1x1x256xf32>,
    %c0_i32_24 = arith.constant 0 : i32
    %42 = arith.cmpi eq, %arg1, %c0_i32_24 : i32
    %43 = arith.extui %42 : i1 to i32
    %c0_i32_25 = arith.constant 0 : i32
    %44 = arith.cmpi ne, %43, %c0_i32_25 : i32
    scf.if %44 {
      %c0_26 = arith.constant 0 : index
      %c0_27 = arith.constant 0 : index
      %45 = vector.load %arg8[%c0_26, %c0_27] : memref<256x1xf32, #tpu.memory_space<vmem>>, vector<256x1xf32>
      %46 = math.log %45 : vector<256x1xf32>
      %c0_28 = arith.constant 0 : index
      %c0_29 = arith.constant 0 : index
      %47 = vector.load %arg7[%c0_28, %c0_29] : memref<256x1xf32, #tpu.memory_space<vmem>>, vector<256x1xf32>
      %48 = arith.addf %46, %47 : vector<256x1xf32>
      %c0_30 = arith.constant 0 : index
      %c0_31 = arith.constant 0 : index
      %49 = vector.load %arg4[%c0_30, %c0_31] : memref<256x1xf32, #tpu.memory_space<vmem>>, vector<256x1xf32>
      tpu.vector_store %arg4[%c0_30, %c0_31], %48 {strides = array<i32>} : memref<256x1xf32, #tpu.memory_space<vmem>>, vector<256x1xf32>,
    } else {
    }
    return
  }
  func.func @transform_0(%arg0: i32, %arg1: i32) -> (i32, i32) {
    %c0_i32 = arith.constant 0 : i32
    %c0_i32_0 = arith.constant 0 : i32
    return %arg0, %c0_i32 : i32, i32
  }
  func.func @transform_1(%arg0: i32, %arg1: i32) -> (i32, i32) {
    %c0_i32 = arith.constant 0 : i32
    %c0_i32_0 = arith.constant 0 : i32
    return %arg1, %c0_i32 : i32, i32
  }
  func.func @transform_2(%arg0: i32, %arg1: i32) -> (i32, i32) {
    %c0_i32 = arith.constant 0 : i32
    %c0_i32_0 = arith.constant 0 : i32
    return %arg0, %c0_i32 : i32, i32
  }
  func.func @transform_3(%arg0: i32, %arg1: i32) -> (i32, i32, i32, i32) {
    %c0_i32 = arith.constant 0 : i32
    %c0_i32_0 = arith.constant 0 : i32
    %c0_i32_1 = arith.constant 0 : i32
    %c0_i32_2 = arith.constant 0 : i32
    return %c0_i32, %arg0, %c0_i32_0, %c0_i32_1 : i32, i32, i32, i32
  }
  func.func @transform_4(%arg0: i32, %arg1: i32) -> (i32, i32, i32, i32) {
    %c0_i32 = arith.constant 0 : i32
    %c0_i32_0 = arith.constant 0 : i32
    %c0_i32_1 = arith.constant 0 : i32
    %c0_i32_2 = arith.constant 0 : i32
    return %c0_i32, %arg0, %c0_i32_0, %c0_i32_1 : i32, i32, i32, i32
  }
}

</mosaic_0001>

<llo_original>
// kernel: tpu_custom_call.1
$region0: #{tpu_custom_call.1}
  #allocation0 [shape = 'u32[]', space=smem, size = 0x4, offset = 0x4, fixed_abs, tag = 'smem constant byte address 0x4 - core index']
  #allocation1 [shape = 'u32[144,128]{1,0:T(1,128)}', space=vmem, size = 0x12000, scoped, tag = 'internal scratch']
  #allocation2 [shape = 'f32[256,1]{1,0:T(8,128)}', space=vmem, size = 0x20000, scoped, tag = 'scratch operand']
  #allocation3 [shape = 'f32[256,1]{1,0:T(8,128)}', space=vmem, size = 0x20000, scoped, tag = 'scratch operand']
  %s0 = inlined_call_operand.vmem [shape: bf16[256,64], index: 0, kind: input, shape index: {}]
  %s1 = inlined_call_operand.vmem [shape: bf16[256,64], index: 1, kind: input, shape index: {}]
  %s2 = inlined_call_operand.vmem [shape: f32[256,1], index: 2, kind: output, shape index: {0}]
  %s3 = inlined_call_operand.hbm [shape: f32[1,1,1,256], index: 3, kind: output, shape index: {1}]
  %s4 = inlined_call_operand.hbm [shape: f32[1,1,1,256], index: 4, kind: output, shape index: {2}]
  %5 = xla_tuple %s2, %s3, %s4
  %s6 = sld [smem:[#allocation0]]
  $region42: #{tpu_custom_call.1} parent=0
    _
  %s8 = ssub.s32 1, %s6
  %s9 = scalar_select 0, %s8, %s6
  $region1: #{tpu_custom_call.1} parent=0
    #allocation4 [shape = 'u8[1024]{0}', space=vmem, size = 0x400, scoped, tag = 'output window, operand 1, single buffered']
    #allocation5 [shape = 's32[1]{0}', space=sflag, size = 0x4, scoped, tag = 'scoped memory for tpu_custom_call.1']
    #allocation6 [shape = 'u8[1024]{0}', space=vmem, size = 0x400, scoped, tag = 'output window, operand 2, single buffered']
    #allocation7 [shape = 's32[1]{0}', space=sflag, size = 0x4, scoped, tag = 'scoped memory for tpu_custom_call.1']
    %10 = vsyncpa [#allocation5], 0
    %11 = vsyncpa [#allocation7], 0
    // Predicated region
    $region2: #{tpu_custom_call.1} parent=1 // pred_check
      _
    $region3: #{tpu_custom_call.1} parent=1 // pred_check_branch
      %13 = sbr.rel (0) target = $region5
    $region4: #{tpu_custom_call.1} parent=1 // pred_region
      _
    $region5: #{tpu_custom_call.1} parent=1 // pred_fallthru
      _
    // Predicated region
    $region6: #{tpu_custom_call.1} parent=1 // pred_check
      _
    $region7: #{tpu_custom_call.1} parent=1 // pred_check_branch
      %15 = sbr.rel (0) target = $region9
    $region8: #{tpu_custom_call.1} parent=1 // pred_region
      _
    $region9: #{tpu_custom_call.1} parent=1 // pred_fallthru
      _
    %p17 = scmp.eq.s32.totalorder 0, 0
    // Predicated region
    $region10: #{tpu_custom_call.1} parent=1 // pred_check
      %p18 = pneg %p17
    $region11: #{tpu_custom_call.1} parent=1 // pred_check_branch
      %20 = sbr.rel (%p18) target = $region13
    $region12: #{tpu_custom_call.1} parent=1 // pred_region
      %vm21 = vcmask 7168
      %22 = vst.msk [vmem:[#allocation2] sm:$0xff] %vm21, -1e+30
      %23 = vst.msk [vmem:[#allocation2 + $0x8] sm:$0xff] %vm21, -1e+30
      %24 = vst.msk [vmem:[#allocation2 + $0x10] sm:$0xff] %vm21, -1e+30
      %25 = vst.msk [vmem:[#allocation2 + $0x18] sm:$0xff] %vm21, -1e+30
      %26 = vst.msk [vmem:[#allocation2 + $0x20] sm:$0xff] %vm21, -1e+30
      %27 = vst.msk [vmem:[#allocation2 + $0x28] sm:$0xff] %vm21, -1e+30
      %28 = vst.msk [vmem:[#allocation2 + $0x30] sm:$0xff] %vm21, -1e+30
      %29 = vst.msk [vmem:[#allocation2 + $0x38] sm:$0xff] %vm21, -1e+30
      %30 = vst.msk [vmem:[#allocation2 + $0x40] sm:$0xff] %vm21, -1e+30
      %31 = vst.msk [vmem:[#allocation2 + $0x48] sm:$0xff] %vm21, -1e+30
      %32 = vst.msk [vmem:[#allocation2 + $0x50] sm:$0xff] %vm21, -1e+30
      %33 = vst.msk [vmem:[#allocation2 + $0x58] sm:$0xff] %vm21, -1e+30
      %34 = vst.msk [vmem:[#allocation2 + $0x60] sm:$0xff] %vm21, -1e+30
      %35 = vst.msk [vmem:[#allocation2 + $0x68] sm:$0xff] %vm21, -1e+30
      %36 = vst.msk [vmem:[#allocation2 + $0x70] sm:$0xff] %vm21, -1e+30
      %37 = vst.msk [vmem:[#allocation2 + $0x78] sm:$0xff] %vm21, -1e+30
      %38 = vst.msk [vmem:[#allocation2 + $0x80] sm:$0xff] %vm21, -1e+30
      %39 = vst.msk [vmem:[#allocation2 + $0x88] sm:$0xff] %vm21, -1e+30
      %40 = vst.msk [vmem:[#allocation2 + $0x90] sm:$0xff] %vm21, -1e+30
      %41 = vst.msk [vmem:[#allocation2 + $0x98] sm:$0xff] %vm21, -1e+30
      %42 = vst.msk [vmem:[#allocation2 + $0xa0] sm:$0xff] %vm21, -1e+30
      %43 = vst.msk [vmem:[#allocation2 + $0xa8] sm:$0xff] %vm21, -1e+30
      %44 = vst.msk [vmem:[#allocation2 + $0xb0] sm:$0xff] %vm21, -1e+30
      %45 = vst.msk [vmem:[#allocation2 + $0xb8] sm:$0xff] %vm21, -1e+30
      %46 = vst.msk [vmem:[#allocation2 + $0xc0] sm:$0xff] %vm21, -1e+30
      %47 = vst.msk [vmem:[#allocation2 + $0xc8] sm:$0xff] %vm21, -1e+30
      %48 = vst.msk [vmem:[#allocation2 + $0xd0] sm:$0xff] %vm21, -1e+30
      %49 = vst.msk [vmem:[#allocation2 + $0xd8] sm:$0xff] %vm21, -1e+30
      %50 = vst.msk [vmem:[#allocation2 + $0xe0] sm:$0xff] %vm21, -1e+30
      %51 = vst.msk [vmem:[#allocation2 + $0xe8] sm:$0xff] %vm21, -1e+30
      %52 = vst.msk [vmem:[#allocation2 + $0xf0] sm:$0xff] %vm21, -1e+30
      %53 = vst.msk [vmem:[#allocation2 + $0xf8] sm:$0xff] %vm21, -1e+30
      %54 = vst.msk [vmem:[#allocation3] sm:$0xff] %vm21, 0.0
      %55 = vst.msk [vmem:[#allocation3 + $0x8] sm:$0xff] %vm21, 0.0
      %56 = vst.msk [vmem:[#allocation3 + $0x10] sm:$0xff] %vm21, 0.0
      %57 = vst.msk [vmem:[#allocation3 + $0x18] sm:$0xff] %vm21, 0.0
      %58 = vst.msk [vmem:[#allocation3 + $0x20] sm:$0xff] %vm21, 0.0
      %59 = vst.msk [vmem:[#allocation3 + $0x28] sm:$0xff] %vm21, 0.0
      %60 = vst.msk [vmem:[#allocation3 + $0x30] sm:$0xff] %vm21, 0.0
      %61 = vst.msk [vmem:[#allocation3 + $0x38] sm:$0xff] %vm21, 0.0
      %62 = vst.msk [vmem:[#allocation3 + $0x40] sm:$0xff] %vm21, 0.0
      %63 = vst.msk [vmem:[#allocation3 + $0x48] sm:$0xff] %vm21, 0.0
      %64 = vst.msk [vmem:[#allocation3 + $0x50] sm:$0xff] %vm21, 0.0
      %65 = vst.msk [vmem:[#allocation3 + $0x58] sm:$0xff] %vm21, 0.0
      %66 = vst.msk [vmem:[#allocation3 + $0x60] sm:$0xff] %vm21, 0.0
      %67 = vst.msk [vmem:[#allocation3 + $0x68] sm:$0xff] %vm21, 0.0
      %68 = vst.msk [vmem:[#allocation3 + $0x70] sm:$0xff] %vm21, 0.0
      %69 = vst.msk [vmem:[#allocation3 + $0x78] sm:$0xff] %vm21, 0.0
      %70 = vst.msk [vmem:[#allocation3 + $0x80] sm:$0xff] %vm21, 0.0
      %71 = vst.msk [vmem:[#allocation3 + $0x88] sm:$0xff] %vm21, 0.0
      %72 = vst.msk [vmem:[#allocation3 + $0x90] sm:$0xff] %vm21, 0.0
      %73 = vst.msk [vmem:[#allocation3 + $0x98] sm:$0xff] %vm21, 0.0
      %74 = vst.msk [vmem:[#allocation3 + $0xa0] sm:$0xff] %vm21, 0.0
      %75 = vst.msk [vmem:[#allocation3 + $0xa8] sm:$0xff] %vm21, 0.0
      %76 = vst.msk [vmem:[#allocation3 + $0xb0] sm:$0xff] %vm21, 0.0
      %77 = vst.msk [vmem:[#allocation3 + $0xb8] sm:$0xff] %vm21, 0.0
      %78 = vst.msk [vmem:[#allocation3 + $0xc0] sm:$0xff] %vm21, 0.0
      %79 = vst.msk [vmem:[#allocation3 + $0xc8] sm:$0xff] %vm21, 0.0
      %80 = vst.msk [vmem:[#allocation3 + $0xd0] sm:$0xff] %vm21, 0.0
      %81 = vst.msk [vmem:[#allocation3 + $0xd8] sm:$0xff] %vm21, 0.0
      %82 = vst.msk [vmem:[#allocation3 + $0xe0] sm:$0xff] %vm21, 0.0
      %83 = vst.msk [vmem:[#allocation3 + $0xe8] sm:$0xff] %vm21, 0.0
      %84 = vst.msk [vmem:[#allocation3 + $0xf0] sm:$0xff] %vm21, 0.0
      %85 = vst.msk [vmem:[#allocation3 + $0xf8] sm:$0xff] %vm21, 0.0
    $region13: #{tpu_custom_call.1} parent=1 // pred_fallthru
      _
    %v86 = vld [vmem:[%s0] sm:$0xf]
    %v87 = vld [vmem:[%s0 + $0x4] sm:$0xf]
    %v88 = vld [vmem:[%s0 + $0x8] sm:$0xf]
    %v89 = vld [vmem:[%s0 + $0xc] sm:$0xf]
    %v90 = vld [vmem:[%s0 + $0x10] sm:$0xf]
    %v91 = vld [vmem:[%s0 + $0x14] sm:$0xf]
    %v92 = vld [vmem:[%s0 + $0x18] sm:$0xf]
    %v93 = vld [vmem:[%s0 + $0x1c] sm:$0xf]
    %v94 = vld [vmem:[%s0 + $0x20] sm:$0xf]
    %v95 = vld [vmem:[%s0 + $0x24] sm:$0xf]
    %v96 = vld [vmem:[%s0 + $0x28] sm:$0xf]
    %v97 = vld [vmem:[%s0 + $0x2c] sm:$0xf]
    %v98 = vld [vmem:[%s0 + $0x30] sm:$0xf]
    %v99 = vld [vmem:[%s0 + $0x34] sm:$0xf]
    %v100 = vld [vmem:[%s0 + $0x38] sm:$0xf]
    %v101 = vld [vmem:[%s0 + $0x3c] sm:$0xf]
    %v102 = vld [vmem:[%s0 + $0x40] sm:$0xf]
    %v103 = vld [vmem:[%s0 + $0x44] sm:$0xf]
    %v104 = vld [vmem:[%s0 + $0x48] sm:$0xf]
    %v105 = vld [vmem:[%s0 + $0x4c] sm:$0xf]
    %v106 = vld [vmem:[%s0 + $0x50] sm:$0xf]
    %v107 = vld [vmem:[%s0 + $0x54] sm:$0xf]
    %v108 = vld [vmem:[%s0 + $0x58] sm:$0xf]
    %v109 = vld [vmem:[%s0 + $0x5c] sm:$0xf]
    %v110 = vld [vmem:[%s0 + $0x60] sm:$0xf]
    %v111 = vld [vmem:[%s0 + $0x64] sm:$0xf]
    %v112 = vld [vmem:[%s0 + $0x68] sm:$0xf]
    %v113 = vld [vmem:[%s0 + $0x6c] sm:$0xf]
    %v114 = vld [vmem:[%s0 + $0x70] sm:$0xf]
    %v115 = vld [vmem:[%s0 + $0x74] sm:$0xf]
    %v116 = vld [vmem:[%s0 + $0x78] sm:$0xf]
    %v117 = vld [vmem:[%s0 + $0x7c] sm:$0xf]
    %v118 = vld [vmem:[%s1] sm:$0xf]
    %v119 = vld [vmem:[%s1 + $0x4] sm:$0xf]
    %v120 = vld [vmem:[%s1 + $0x8] sm:$0xf]
    %v121 = vld [vmem:[%s1 + $0xc] sm:$0xf]
    %v122 = vld [vmem:[%s1 + $0x10] sm:$0xf]
    %v123 = vld [vmem:[%s1 + $0x14] sm:$0xf]
    %v124 = vld [vmem:[%s1 + $0x18] sm:$0xf]
    %v125 = vld [vmem:[%s1 + $0x1c] sm:$0xf]
    %v126 = vld [vmem:[%s1 + $0x20] sm:$0xf]
    %v127 = vld [vmem:[%s1 + $0x24] sm:$0xf]
    %v128 = vld [vmem:[%s1 + $0x28] sm:$0xf]
    %v129 = vld [vmem:[%s1 + $0x2c] sm:$0xf]
    %v130 = vld [vmem:[%s1 + $0x30] sm:$0xf]
    %v131 = vld [vmem:[%s1 + $0x34] sm:$0xf]
    %v132 = vld [vmem:[%s1 + $0x38] sm:$0xf]
    %v133 = vld [vmem:[%s1 + $0x3c] sm:$0xf]
    %v134 = vld [vmem:[%s1 + $0x40] sm:$0xf]
    %v135 = vld [vmem:[%s1 + $0x44] sm:$0xf]
    %v136 = vld [vmem:[%s1 + $0x48] sm:$0xf]
    %v137 = vld [vmem:[%s1 + $0x4c] sm:$0xf]
    %v138 = vld [vmem:[%s1 + $0x50] sm:$0xf]
    %v139 = vld [vmem:[%s1 + $0x54] sm:$0xf]
    %v140 = vld [vmem:[%s1 + $0x58] sm:$0xf]
    %v141 = vld [vmem:[%s1 + $0x5c] sm:$0xf]
    %v142 = vld [vmem:[%s1 + $0x60] sm:$0xf]
    %v143 = vld [vmem:[%s1 + $0x64] sm:$0xf]
    %v144 = vld [vmem:[%s1 + $0x68] sm:$0xf]
    %v145 = vld [vmem:[%s1 + $0x6c] sm:$0xf]
    %v146 = vld [vmem:[%s1 + $0x70] sm:$0xf]
    %v147 = vld [vmem:[%s1 + $0x74] sm:$0xf]
    %v148 = vld [vmem:[%s1 + $0x78] sm:$0xf]
    %v149 = vld [vmem:[%s1 + $0x7c] sm:$0xf]
    %v182 = vunpack.c.l.b16 %v86
    %v183 = vunpack.c.l.b16 %v87
    %v184 = vunpack.c.l.b16 %v88
    %v185 = vunpack.c.l.b16 %v89
    %v186 = vunpack.c.l.b16 %v90
    %v187 = vunpack.c.l.b16 %v91
    %v188 = vunpack.c.l.b16 %v92
    %v189 = vunpack.c.l.b16 %v93
    %v190 = vunpack.c.l.b16 %v94
    %v191 = vunpack.c.l.b16 %v95
    %v192 = vunpack.c.l.b16 %v96
    %v193 = vunpack.c.l.b16 %v97
    %v194 = vunpack.c.l.b16 %v98
    %v195 = vunpack.c.l.b16 %v99
    %v196 = vunpack.c.l.b16 %v100
    %v197 = vunpack.c.l.b16 %v101
    %v198 = vunpack.c.l.b16 %v102
    %v199 = vunpack.c.l.b16 %v103
    %v200 = vunpack.c.l.b16 %v104
    %v201 = vunpack.c.l.b16 %v105
    %v202 = vunpack.c.l.b16 %v106
    %v203 = vunpack.c.l.b16 %v107
    %v204 = vunpack.c.l.b16 %v108
    %v205 = vunpack.c.l.b16 %v109
    %v206 = vunpack.c.l.b16 %v110
    %v207 = vunpack.c.l.b16 %v111
    %v208 = vunpack.c.l.b16 %v112
    %v209 = vunpack.c.l.b16 %v113
    %v210 = vunpack.c.l.b16 %v114
    %v211 = vunpack.c.l.b16 %v115
    %v212 = vunpack.c.l.b16 %v116
    %v213 = vunpack.c.l.b16 %v117
    %v214 = vpack.c.b16 %v183, %v182
    %v215 = vpack.c.b16 %v185, %v184
    %v216 = vpack.c.b16 %v187, %v186
    %v217 = vpack.c.b16 %v189, %v188
    %v218 = vpack.c.b16 %v191, %v190
    %v219 = vpack.c.b16 %v193, %v192
    %v220 = vpack.c.b16 %v195, %v194
    %v221 = vpack.c.b16 %v197, %v196
    %v222 = vpack.c.b16 %v199, %v198
    %v223 = vpack.c.b16 %v201, %v200
    %v224 = vpack.c.b16 %v203, %v202
    %v225 = vpack.c.b16 %v205, %v204
    %v226 = vpack.c.b16 %v207, %v206
    %v227 = vpack.c.b16 %v209, %v208
    %v228 = vpack.c.b16 %v211, %v210
    %v229 = vpack.c.b16 %v213, %v212
    %v262 = vunpack.c.l.b16 %v118
    %v263 = vunpack.c.l.b16 %v119
    %v264 = vunpack.c.l.b16 %v120
    %v265 = vunpack.c.l.b16 %v121
    %v266 = vunpack.c.l.b16 %v122
    %v267 = vunpack.c.l.b16 %v123
    %v268 = vunpack.c.l.b16 %v124
    %v269 = vunpack.c.l.b16 %v125
    %v270 = vunpack.c.l.b16 %v126
    %v271 = vunpack.c.l.b16 %v127
    %v272 = vunpack.c.l.b16 %v128
    %v273 = vunpack.c.l.b16 %v129
    %v274 = vunpack.c.l.b16 %v130
    %v275 = vunpack.c.l.b16 %v131
    %v276 = vunpack.c.l.b16 %v132
    %v277 = vunpack.c.l.b16 %v133
    %v278 = vunpack.c.l.b16 %v134
    %v279 = vunpack.c.l.b16 %v135
    %v280 = vunpack.c.l.b16 %v136
    %v281 = vunpack.c.l.b16 %v137
    %v282 = vunpack.c.l.b16 %v138
    %v283 = vunpack.c.l.b16 %v139
    %v284 = vunpack.c.l.b16 %v140
    %v285 = vunpack.c.l.b16 %v141
    %v286 = vunpack.c.l.b16 %v142
    %v287 = vunpack.c.l.b16 %v143
    %v288 = vunpack.c.l.b16 %v144
    %v289 = vunpack.c.l.b16 %v145
    %v290 = vunpack.c.l.b16 %v146
    %v291 = vunpack.c.l.b16 %v147
    %v292 = vunpack.c.l.b16 %v148
    %v293 = vunpack.c.l.b16 %v149
    %v294 = vpack.c.b16 %v263, %v262
    %v295 = vpack.c.b16 %v265, %v264
    %v296 = vpack.c.b16 %v267, %v266
    %v297 = vpack.c.b16 %v269, %v268
    %v298 = vpack.c.b16 %v271, %v270
    %v299 = vpack.c.b16 %v273, %v272
    %v300 = vpack.c.b16 %v275, %v274
    %v301 = vpack.c.b16 %v277, %v276
    %v302 = vpack.c.b16 %v279, %v278
    %v303 = vpack.c.b16 %v281, %v280
    %v304 = vpack.c.b16 %v283, %v282
    %v305 = vpack.c.b16 %v285, %v284
    %v306 = vpack.c.b16 %v287, %v286
    %v307 = vpack.c.b16 %v289, %v288
    %v308 = vpack.c.b16 %v291, %v290
    %v309 = vpack.c.b16 %v293, %v292
    %vm310 = vcmask 523264
    %v312 = vsel %vm310, %v214, 0
    %v315 = vsel %vm310, %v215, 0
    %v318 = vsel %vm310, %v216, 0
    %v321 = vsel %vm310, %v217, 0
    %v324 = vsel %vm310, %v218, 0
    %v327 = vsel %vm310, %v219, 0
    %v330 = vsel %vm310, %v220, 0
    %v333 = vsel %vm310, %v221, 0
    %v336 = vsel %vm310, %v222, 0
    %v339 = vsel %vm310, %v223, 0
    %v342 = vsel %vm310, %v224, 0
    %v345 = vsel %vm310, %v225, 0
    %v348 = vsel %vm310, %v226, 0
    %v351 = vsel %vm310, %v227, 0
    %v354 = vsel %vm310, %v228, 0
    %v357 = vsel %vm310, %v229, 0
    %v360 = vsel %vm310, %v294, 0
    %v363 = vsel %vm310, %v295, 0
    %v366 = vsel %vm310, %v296, 0
    %v369 = vsel %vm310, %v297, 0
    %v372 = vsel %vm310, %v298, 0
    %v375 = vsel %vm310, %v299, 0
    %v378 = vsel %vm310, %v300, 0
    %v381 = vsel %vm310, %v301, 0
    %v384 = vsel %vm310, %v302, 0
    %v387 = vsel %vm310, %v303, 0
    %v390 = vsel %vm310, %v304, 0
    %v393 = vsel %vm310, %v305, 0
    %v396 = vsel %vm310, %v306, 0
    %v399 = vsel %vm310, %v307, 0
    %v402 = vsel %vm310, %v308, 0
    %v405 = vsel %vm310, %v309, 0
    %407 = vmatprep.subr.bf16.mxu0 0
    %408 = vmatpush1.bf16.xpose.msra.mxu0 %v360
    %409 = vmatprep.subr.bf16.mxu0 0
    %410 = vmatpush1.bf16.xpose.msra.mxu0 %v363
    %411 = vmatprep.subr.bf16.mxu0 0
    %412 = vmatpush1.bf16.xpose.msra.mxu0 %v366
    %413 = vmatprep.subr.bf16.mxu0 0
    %414 = vmatpush1.bf16.xpose.msra.mxu0 %v369
    %415 = vmatprep.subr.bf16.mxu0 0
    %416 = vmatpush1.bf16.xpose.msra.mxu0 %v372
    %417 = vmatprep.subr.bf16.mxu0 0
    %418 = vmatpush1.bf16.xpose.msra.mxu0 %v375
    %419 = vmatprep.subr.bf16.mxu0 0
    %420 = vmatpush1.bf16.xpose.msra.mxu0 %v378
    %421 = vmatprep.subr.bf16.mxu0 0
    %422 = vmatpush1.bf16.xpose.msra.mxu0 %v381
    %423 = vmatprep.subr.bf16.mxu0 0
    %424 = vmatpush1.bf16.xpose.msra.mxu0 %v384
    %425 = vmatprep.subr.bf16.mxu0 0
    %426 = vmatpush1.bf16.xpose.msra.mxu0 %v387
    %427 = vmatprep.subr.bf16.mxu0 0
    %428 = vmatpush1.bf16.xpose.msra.mxu0 %v390
    %429 = vmatprep.subr.bf16.mxu0 0
    %430 = vmatpush1.bf16.xpose.msra.mxu0 %v393
    %431 = vmatprep.subr.bf16.mxu0 0
    %432 = vmatpush1.bf16.xpose.msra.mxu0 %v396
    %433 = vmatprep.subr.bf16.mxu0 0
    %434 = vmatpush1.bf16.xpose.msra.mxu0 %v399
    %435 = vmatprep.subr.bf16.mxu0 0
    %436 = vmatpush1.bf16.xpose.msra.mxu0 %v402
    %437 = vmatprep.subr.bf16.mxu0 0
    %438 = vmatpush1.bf16.xpose.msra.mxu0 %v405
    %439 = vmatprep.mubr.bf16.mxu0 0
    %440 = vmatmul.mubr.bf16.gmra.mrb[0].mxu0 %v312
    %v441 = vpop.f32.mrb[0].mxu0
    %v442 = vadd.f32 0.0, %v441
    %v443 = vpop.f32.mrb[0].mxu0
    %v444 = vadd.f32 0.0, %v443
    %v445 = vpop.f32.mrb[0].mxu0
    %v446 = vadd.f32 0.0, %v445
    %v447 = vpop.f32.mrb[0].mxu0
    %v448 = vadd.f32 0.0, %v447
    %449 = vmatprep.mubr.bf16.mxu0 0
    %450 = vmatmul.mubr.bf16.gmra.mrb[0].mxu0 %v315
    %v451 = vpop.f32.mrb[0].mxu0
    %v452 = vadd.f32 0.0, %v451
    %v453 = vpop.f32.mrb[0].mxu0
    %v454 = vadd.f32 0.0, %v453
    %v455 = vpop.f32.mrb[0].mxu0
    %v456 = vadd.f32 0.0, %v455
    %v457 = vpop.f32.mrb[0].mxu0
    %v458 = vadd.f32 0.0, %v457
    %459 = vmatprep.mubr.bf16.mxu0 0
    %460 = vmatmul.mubr.bf16.gmra.mrb[0].mxu0 %v318
    %v461 = vpop.f32.mrb[0].mxu0
    %v462 = vadd.f32 0.0, %v461
    %v463 = vpop.f32.mrb[0].mxu0
    %v464 = vadd.f32 0.0, %v463
    %v465 = vpop.f32.mrb[0].mxu0
    %v466 = vadd.f32 0.0, %v465
    %v467 = vpop.f32.mrb[0].mxu0
    %v468 = vadd.f32 0.0, %v467
    %469 = vmatprep.mubr.bf16.mxu0 0
    %470 = vmatmul.mubr.bf16.gmra.mrb[0].mxu0 %v321
    %v471 = vpop.f32.mrb[0].mxu0
    %v472 = vadd.f32 0.0, %v471
    %v473 = vpop.f32.mrb[0].mxu0
    %v474 = vadd.f32 0.0, %v473
    %v475 = vpop.f32.mrb[0].mxu0
    %v476 = vadd.f32 0.0, %v475
    %v477 = vpop.f32.mrb[0].mxu0
    %v478 = vadd.f32 0.0, %v477
    %479 = vmatprep.mubr.bf16.mxu0 0
    %480 = vmatmul.mubr.bf16.gmra.mrb[0].mxu0 %v324
    %v481 = vpop.f32.mrb[0].mxu0
    %v482 = vadd.f32 0.0, %v481
    %v483 = vpop.f32.mrb[0].mxu0
    %v484 = vadd.f32 0.0, %v483
    %v485 = vpop.f32.mrb[0].mxu0
    %v486 = vadd.f32 0.0, %v485
    %v487 = vpop.f32.mrb[0].mxu0
    %v488 = vadd.f32 0.0, %v487
    %489 = vmatprep.mubr.bf16.mxu0 0
    %490 = vmatmul.mubr.bf16.gmra.mrb[0].mxu0 %v327
    %v491 = vpop.f32.mrb[0].mxu0
    %v492 = vadd.f32 0.0, %v491
    %v493 = vpop.f32.mrb[0].mxu0
    %v494 = vadd.f32 0.0, %v493
    %v495 = vpop.f32.mrb[0].mxu0
    %v496 = vadd.f32 0.0, %v495
    %v497 = vpop.f32.mrb[0].mxu0
    %v498 = vadd.f32 0.0, %v497
    %499 = vmatprep.mubr.bf16.mxu0 0
    %500 = vmatmul.mubr.bf16.gmra.mrb[0].mxu0 %v330
    %v501 = vpop.f32.mrb[0].mxu0
    %v502 = vadd.f32 0.0, %v501
    %v503 = vpop.f32.mrb[0].mxu0
    %v504 = vadd.f32 0.0, %v503
    %v505 = vpop.f32.mrb[0].mxu0
    %v506 = vadd.f32 0.0, %v505
    %v507 = vpop.f32.mrb[0].mxu0
    %v508 = vadd.f32 0.0, %v507
    %509 = vmatprep.mubr.bf16.mxu0 0
    %510 = vmatmul.mubr.bf16.gmra.mrb[0].mxu0 %v333
    %v511 = vpop.f32.mrb[0].mxu0
    %v512 = vadd.f32 0.0, %v511
    %v513 = vpop.f32.mrb[0].mxu0
    %v514 = vadd.f32 0.0, %v513
    %v515 = vpop.f32.mrb[0].mxu0
    %v516 = vadd.f32 0.0, %v515
    %v517 = vpop.f32.mrb[0].mxu0
    %v518 = vadd.f32 0.0, %v517
    %519 = vmatprep.mubr.bf16.mxu0 0
    %520 = vmatmul.mubr.bf16.gmra.mrb[0].mxu0 %v336
    %v521 = vpop.f32.mrb[0].mxu0
    %v522 = vadd.f32 0.0, %v521
    %v523 = vpop.f32.mrb[0].mxu0
    %v524 = vadd.f32 0.0, %v523
    %v525 = vpop.f32.mrb[0].mxu0
    %v526 = vadd.f32 0.0, %v525
    %v527 = vpop.f32.mrb[0].mxu0
    %v528 = vadd.f32 0.0, %v527
    %529 = vmatprep.mubr.bf16.mxu0 0
    %530 = vmatmul.mubr.bf16.gmra.mrb[0].mxu0 %v339
    %v531 = vpop.f32.mrb[0].mxu0
    %v532 = vadd.f32 0.0, %v531
    %v533 = vpop.f32.mrb[0].mxu0
    %v534 = vadd.f32 0.0, %v533
    %v535 = vpop.f32.mrb[0].mxu0
    %v536 = vadd.f32 0.0, %v535
    %v537 = vpop.f32.mrb[0].mxu0
    %v538 = vadd.f32 0.0, %v537
    %539 = vmatprep.mubr.bf16.mxu0 0
    %540 = vmatmul.mubr.bf16.gmra.mrb[0].mxu0 %v342
    %v541 = vpop.f32.mrb[0].mxu0
    %v542 = vadd.f32 0.0, %v541
    %v543 = vpop.f32.mrb[0].mxu0
    %v544 = vadd.f32 0.0, %v543
    %v545 = vpop.f32.mrb[0].mxu0
    %v546 = vadd.f32 0.0, %v545
    %v547 = vpop.f32.mrb[0].mxu0
    %v548 = vadd.f32 0.0, %v547
    %549 = vmatprep.mubr.bf16.mxu0 0
    %550 = vmatmul.mubr.bf16.gmra.mrb[0].mxu0 %v345
    %v551 = vpop.f32.mrb[0].mxu0
    %v552 = vadd.f32 0.0, %v551
    %v553 = vpop.f32.mrb[0].mxu0
    %v554 = vadd.f32 0.0, %v553
    %v555 = vpop.f32.mrb[0].mxu0
    %v556 = vadd.f32 0.0, %v555
    %v557 = vpop.f32.mrb[0].mxu0
    %v558 = vadd.f32 0.0, %v557
    %559 = vmatprep.mubr.bf16.mxu0 0
    %560 = vmatmul.mubr.bf16.gmra.mrb[0].mxu0 %v348
    %v561 = vpop.f32.mrb[0].mxu0
    %v562 = vadd.f32 0.0, %v561
    %v563 = vpop.f32.mrb[0].mxu0
    %v564 = vadd.f32 0.0, %v563
    %v565 = vpop.f32.mrb[0].mxu0
    %v566 = vadd.f32 0.0, %v565
    %v567 = vpop.f32.mrb[0].mxu0
    %v568 = vadd.f32 0.0, %v567
    %569 = vmatprep.mubr.bf16.mxu0 0
    %570 = vmatmul.mubr.bf16.gmra.mrb[0].mxu0 %v351
    %v571 = vpop.f32.mrb[0].mxu0
    %v572 = vadd.f32 0.0, %v571
    %v573 = vpop.f32.mrb[0].mxu0
    %v574 = vadd.f32 0.0, %v573
    %v575 = vpop.f32.mrb[0].mxu0
    %v576 = vadd.f32 0.0, %v575
    %v577 = vpop.f32.mrb[0].mxu0
    %v578 = vadd.f32 0.0, %v577
    %579 = vmatprep.mubr.bf16.mxu0 0
    %580 = vmatmul.mubr.bf16.gmra.mrb[0].mxu0 %v354
    %v581 = vpop.f32.mrb[0].mxu0
    %v582 = vadd.f32 0.0, %v581
    %v583 = vpop.f32.mrb[0].mxu0
    %v584 = vadd.f32 0.0, %v583
    %v585 = vpop.f32.mrb[0].mxu0
    %v586 = vadd.f32 0.0, %v585
    %v587 = vpop.f32.mrb[0].mxu0
    %v588 = vadd.f32 0.0, %v587
    %589 = vmatprep.mubr.bf16.mxu0 0
    %590 = vmatmul.mubr.bf16.gmra.mrb[0].mxu0 %v357
    %v591 = vpop.f32.mrb[0].mxu0
    %v592 = vadd.f32 0.0, %v591
    %v593 = vpop.f32.mrb[0].mxu0
    %v594 = vadd.f32 0.0, %v593
    %v595 = vpop.f32.mrb[0].mxu0
    %v596 = vadd.f32 0.0, %v595
    %v597 = vpop.f32.mrb[0].mxu0
    %v598 = vadd.f32 0.0, %v597
    %599 = vdwg.mxu0
    %v600 = vmax.f32 %v442, %v444
    %601 = vmax.xlane.f32.xlu0 %v600
    %v602 = vpop.xlane.xlu0 %601
    %v603 = vmax.f32 %v446, %v448
    %604 = vmax.xlane.f32.xlu0 %v603
    %v605 = vpop.xlane.xlu0 %604
    %v606 = vmax.f32 %v452, %v454
    %607 = vmax.xlane.f32.xlu0 %v606
    %v608 = vpop.xlane.xlu0 %607
    %v609 = vmax.f32 %v456, %v458
    %610 = vmax.xlane.f32.xlu0 %v609
    %v611 = vpop.xlane.xlu0 %610
    %v612 = vmax.f32 %v462, %v464
    %613 = vmax.xlane.f32.xlu0 %v612
    %v614 = vpop.xlane.xlu0 %613
    %v615 = vmax.f32 %v466, %v468
    %616 = vmax.xlane.f32.xlu0 %v615
    %v617 = vpop.xlane.xlu0 %616
    %v618 = vmax.f32 %v472, %v474
    %619 = vmax.xlane.f32.xlu0 %v618
    %v620 = vpop.xlane.xlu0 %619
    %v621 = vmax.f32 %v476, %v478
    %622 = vmax.xlane.f32.xlu0 %v621
    %v623 = vpop.xlane.xlu0 %622
    %v624 = vmax.f32 %v482, %v484
    %625 = vmax.xlane.f32.xlu0 %v624
    %v626 = vpop.xlane.xlu0 %625
    %v627 = vmax.f32 %v486, %v488
    %628 = vmax.xlane.f32.xlu0 %v627
    %v629 = vpop.xlane.xlu0 %628
    %v630 = vmax.f32 %v492, %v494
    %631 = vmax.xlane.f32.xlu0 %v630
    %v632 = vpop.xlane.xlu0 %631
    %v633 = vmax.f32 %v496, %v498
    %634 = vmax.xlane.f32.xlu0 %v633
    %v635 = vpop.xlane.xlu0 %634
    %v636 = vmax.f32 %v502, %v504
    %637 = vmax.xlane.f32.xlu0 %v636
    %v638 = vpop.xlane.xlu0 %637
    %v639 = vmax.f32 %v506, %v508
    %640 = vmax.xlane.f32.xlu0 %v639
    %v641 = vpop.xlane.xlu0 %640
    %v642 = vmax.f32 %v512, %v514
    %643 = vmax.xlane.f32.xlu0 %v642
    %v644 = vpop.xlane.xlu0 %643
    %v645 = vmax.f32 %v516, %v518
    %646 = vmax.xlane.f32.xlu0 %v645
    %v647 = vpop.xlane.xlu0 %646
    %v648 = vmax.f32 %v522, %v524
    %649 = vmax.xlane.f32.xlu0 %v648
    %v650 = vpop.xlane.xlu0 %649
    %v651 = vmax.f32 %v526, %v528
    %652 = vmax.xlane.f32.xlu0 %v651
    %v653 = vpop.xlane.xlu0 %652
    %v654 = vmax.f32 %v532, %v534
    %655 = vmax.xlane.f32.xlu0 %v654
    %v656 = vpop.xlane.xlu0 %655
    %v657 = vmax.f32 %v536, %v538
    %658 = vmax.xlane.f32.xlu0 %v657
    %v659 = vpop.xlane.xlu0 %658
    %v660 = vmax.f32 %v542, %v544
    %661 = vmax.xlane.f32.xlu0 %v660
    %v662 = vpop.xlane.xlu0 %661
    %v663 = vmax.f32 %v546, %v548
    %664 = vmax.xlane.f32.xlu0 %v663
    %v665 = vpop.xlane.xlu0 %664
    %v666 = vmax.f32 %v552, %v554
    %667 = vmax.xlane.f32.xlu0 %v666
    %v668 = vpop.xlane.xlu0 %667
    %v669 = vmax.f32 %v556, %v558
    %670 = vmax.xlane.f32.xlu0 %v669
    %v671 = vpop.xlane.xlu0 %670
    %v672 = vmax.f32 %v562, %v564
    %673 = vmax.xlane.f32.xlu0 %v672
    %v674 = vpop.xlane.xlu0 %673
    %v675 = vmax.f32 %v566, %v568
    %676 = vmax.xlane.f32.xlu0 %v675
    %v677 = vpop.xlane.xlu0 %676
    %v678 = vmax.f32 %v572, %v574
    %679 = vmax.xlane.f32.xlu0 %v678
    %v680 = vpop.xlane.xlu0 %679
    %v681 = vmax.f32 %v576, %v578
    %682 = vmax.xlane.f32.xlu0 %v681
    %v683 = vpop.xlane.xlu0 %682
    %v684 = vmax.f32 %v582, %v584
    %685 = vmax.xlane.f32.xlu0 %v684
    %v686 = vpop.xlane.xlu0 %685
    %v687 = vmax.f32 %v586, %v588
    %688 = vmax.xlane.f32.xlu0 %v687
    %v689 = vpop.xlane.xlu0 %688
    %v690 = vmax.f32 %v592, %v594
    %691 = vmax.xlane.f32.xlu0 %v690
    %v692 = vpop.xlane.xlu0 %691
    %v693 = vmax.f32 %v596, %v598
    %694 = vmax.xlane.f32.xlu0 %v693
    %v695 = vpop.xlane.xlu0 %694
    %v696 = vmax.f32 %v602, %v614
    %v697 = vmax.f32 %v605, %v617
    %v698 = vmax.f32 %v608, %v620
    %v699 = vmax.f32 %v611, %v623
    %v700 = vmax.f32 %v696, %v626
    %v701 = vmax.f32 %v697, %v629
    %v702 = vmax.f32 %v698, %v632
    %v703 = vmax.f32 %v699, %v635
    %v704 = vmax.f32 %v700, %v638
    %v705 = vmax.f32 %v701, %v641
    %v706 = vmax.f32 %v702, %v644
    %v707 = vmax.f32 %v703, %v647
    %v708 = vmax.f32 %v704, %v650
    %v709 = vmax.f32 %v705, %v653
    %v710 = vmax.f32 %v706, %v656
    %v711 = vmax.f32 %v707, %v659
    %v712 = vmax.f32 %v708, %v662
    %v713 = vmax.f32 %v709, %v665
    %v714 = vmax.f32 %v710, %v668
    %v715 = vmax.f32 %v711, %v671
    %v716 = vmax.f32 %v712, %v674
    %v717 = vmax.f32 %v713, %v677
    %v718 = vmax.f32 %v714, %v680
    %v719 = vmax.f32 %v715, %v683
    %v720 = vmax.f32 %v716, %v686
    %v721 = vmax.f32 %v717, %v689
    %v722 = vmax.f32 %v718, %v692
    %v723 = vmax.f32 %v719, %v695
    %v724 = vmax.f32 %v720, %v721
    %v725 = vmax.f32 %v722, %v723
    %v726 = vmax.f32 %v724, %v725
    %v727 = vrot.slane %v726, 4
    %v728 = vmax.f32 %v726, %v727
    %v729 = vrot.slane %v728, 2
    %v730 = vmax.f32 %v728, %v729
    %v731 = vrot.slane %v730, 1
    %v732 = vmax.f32 %v730, %v731
    %v733 = vsub.f32 %v442, %v732
    %v734 = vsub.f32 %v444, %v732
    %v735 = vsub.f32 %v446, %v732
    %v736 = vsub.f32 %v448, %v732
    %v737 = vsub.f32 %v452, %v732
    %v738 = vsub.f32 %v454, %v732
    %v739 = vsub.f32 %v456, %v732
    %v740 = vsub.f32 %v458, %v732
    %v741 = vsub.f32 %v462, %v732
    %v742 = vsub.f32 %v464, %v732
    %v743 = vsub.f32 %v466, %v732
    %v744 = vsub.f32 %v468, %v732
    %v745 = vsub.f32 %v472, %v732
    %v746 = vsub.f32 %v474, %v732
    %v747 = vsub.f32 %v476, %v732
    %v748 = vsub.f32 %v478, %v732
    %v749 = vsub.f32 %v482, %v732
    %v750 = vsub.f32 %v484, %v732
    %v751 = vsub.f32 %v486, %v732
    %v752 = vsub.f32 %v488, %v732
    %v753 = vsub.f32 %v492, %v732
    %v754 = vsub.f32 %v494, %v732
    %v755 = vsub.f32 %v496, %v732
    %v756 = vsub.f32 %v498, %v732
    %v757 = vsub.f32 %v502, %v732
    %v758 = vsub.f32 %v504, %v732
    %v759 = vsub.f32 %v506, %v732
    %v760 = vsub.f32 %v508, %v732
    %v761 = vsub.f32 %v512, %v732
    %v762 = vsub.f32 %v514, %v732
    %v763 = vsub.f32 %v516, %v732
    %v764 = vsub.f32 %v518, %v732
    %v765 = vsub.f32 %v522, %v732
    %v766 = vsub.f32 %v524, %v732
    %v767 = vsub.f32 %v526, %v732
    %v768 = vsub.f32 %v528, %v732
    %v769 = vsub.f32 %v532, %v732
    %v770 = vsub.f32 %v534, %v732
    %v771 = vsub.f32 %v536, %v732
    %v772 = vsub.f32 %v538, %v732
    %v773 = vsub.f32 %v542, %v732
    %v774 = vsub.f32 %v544, %v732
    %v775 = vsub.f32 %v546, %v732
    %v776 = vsub.f32 %v548, %v732
    %v777 = vsub.f32 %v552, %v732
    %v778 = vsub.f32 %v554, %v732
    %v779 = vsub.f32 %v556, %v732
    %v780 = vsub.f32 %v558, %v732
    %v781 = vsub.f32 %v562, %v732
    %v782 = vsub.f32 %v564, %v732
    %v783 = vsub.f32 %v566, %v732
    %v784 = vsub.f32 %v568, %v732
    %v785 = vsub.f32 %v572, %v732
    %v786 = vsub.f32 %v574, %v732
    %v787 = vsub.f32 %v576, %v732
    %v788 = vsub.f32 %v578, %v732
    %v789 = vsub.f32 %v582, %v732
    %v790 = vsub.f32 %v584, %v732
    %v791 = vsub.f32 %v586, %v732
    %v792 = vsub.f32 %v588, %v732
    %v793 = vsub.f32 %v592, %v732
    %v794 = vsub.f32 %v594, %v732
    %v795 = vsub.f32 %v596, %v732
    %v796 = vsub.f32 %v598, %v732
    %v797 = vmul.f32 %v733, 1.442695
    %v798 = vpow.pop %v797
    %v799 = vmul.f32 %v734, 1.442695
    %v800 = vpow.pop %v799
    %v801 = vmul.f32 %v735, 1.442695
    %v802 = vpow.pop %v801
    %v803 = vmul.f32 %v736, 1.442695
    %v804 = vpow.pop %v803
    %v805 = vmul.f32 %v737, 1.442695
    %v806 = vpow.pop %v805
    %v807 = vmul.f32 %v738, 1.442695
    %v808 = vpow.pop %v807
    %v809 = vmul.f32 %v739, 1.442695
    %v810 = vpow.pop %v809
    %v811 = vmul.f32 %v740, 1.442695
    %v812 = vpow.pop %v811
    %v813 = vmul.f32 %v741, 1.442695
    %v814 = vpow.pop %v813
    %v815 = vmul.f32 %v742, 1.442695
    %v816 = vpow.pop %v815
    %v817 = vmul.f32 %v743, 1.442695
    %v818 = vpow.pop %v817
    %v819 = vmul.f32 %v744, 1.442695
    %v820 = vpow.pop %v819
    %v821 = vmul.f32 %v745, 1.442695
    %v822 = vpow.pop %v821
    %v823 = vmul.f32 %v746, 1.442695
    %v824 = vpow.pop %v823
    %v825 = vmul.f32 %v747, 1.442695
    %v826 = vpow.pop %v825
    %v827 = vmul.f32 %v748, 1.442695
    %v828 = vpow.pop %v827
    %v829 = vmul.f32 %v749, 1.442695
    %v830 = vpow.pop %v829
    %v831 = vmul.f32 %v750, 1.442695
    %v832 = vpow.pop %v831
    %v833 = vmul.f32 %v751, 1.442695
    %v834 = vpow.pop %v833
    %v835 = vmul.f32 %v752, 1.442695
    %v836 = vpow.pop %v835
    %v837 = vmul.f32 %v753, 1.442695
    %v838 = vpow.pop %v837
    %v839 = vmul.f32 %v754, 1.442695
    %v840 = vpow.pop %v839
    %v841 = vmul.f32 %v755, 1.442695
    %v842 = vpow.pop %v841
    %v843 = vmul.f32 %v756, 1.442695
    %v844 = vpow.pop %v843
    %v845 = vmul.f32 %v757, 1.442695
    %v846 = vpow.pop %v845
    %v847 = vmul.f32 %v758, 1.442695
    %v848 = vpow.pop %v847
    %v849 = vmul.f32 %v759, 1.442695
    %v850 = vpow.pop %v849
    %v851 = vmul.f32 %v760, 1.442695
    %v852 = vpow.pop %v851
    %v853 = vmul.f32 %v761, 1.442695
    %v854 = vpow.pop %v853
    %v855 = vmul.f32 %v762, 1.442695
    %v856 = vpow.pop %v855
    %v857 = vmul.f32 %v763, 1.442695
    %v858 = vpow.pop %v857
    %v859 = vmul.f32 %v764, 1.442695
    %v860 = vpow.pop %v859
    %v861 = vmul.f32 %v765, 1.442695
    %v862 = vpow.pop %v861
    %v863 = vmul.f32 %v766, 1.442695
    %v864 = vpow.pop %v863
    %v865 = vmul.f32 %v767, 1.442695
    %v866 = vpow.pop %v865
    %v867 = vmul.f32 %v768, 1.442695
    %v868 = vpow.pop %v867
    %v869 = vmul.f32 %v769, 1.442695
    %v870 = vpow.pop %v869
    %v871 = vmul.f32 %v770, 1.442695
    %v872 = vpow.pop %v871
    %v873 = vmul.f32 %v771, 1.442695
    %v874 = vpow.pop %v873
    %v875 = vmul.f32 %v772, 1.442695
    %v876 = vpow.pop %v875
    %v877 = vmul.f32 %v773, 1.442695
    %v878 = vpow.pop %v877
    %v879 = vmul.f32 %v774, 1.442695
    %v880 = vpow.pop %v879
    %v881 = vmul.f32 %v775, 1.442695
    %v882 = vpow.pop %v881
    %v883 = vmul.f32 %v776, 1.442695
    %v884 = vpow.pop %v883
    %v885 = vmul.f32 %v777, 1.442695
    %v886 = vpow.pop %v885
    %v887 = vmul.f32 %v778, 1.442695
    %v888 = vpow.pop %v887
    %v889 = vmul.f32 %v779, 1.442695
    %v890 = vpow.pop %v889
    %v891 = vmul.f32 %v780, 1.442695
    %v892 = vpow.pop %v891
    %v893 = vmul.f32 %v781, 1.442695
    %v894 = vpow.pop %v893
    %v895 = vmul.f32 %v782, 1.442695
    %v896 = vpow.pop %v895
    %v897 = vmul.f32 %v783, 1.442695
    %v898 = vpow.pop %v897
    %v899 = vmul.f32 %v784, 1.442695
    %v900 = vpow.pop %v899
    %v901 = vmul.f32 %v785, 1.442695
    %v902 = vpow.pop %v901
    %v903 = vmul.f32 %v786, 1.442695
    %v904 = vpow.pop %v903
    %v905 = vmul.f32 %v787, 1.442695
    %v906 = vpow.pop %v905
    %v907 = vmul.f32 %v788, 1.442695
    %v908 = vpow.pop %v907
    %v909 = vmul.f32 %v789, 1.442695
    %v910 = vpow.pop %v909
    %v911 = vmul.f32 %v790, 1.442695
    %v912 = vpow.pop %v911
    %v913 = vmul.f32 %v791, 1.442695
    %v914 = vpow.pop %v913
    %v915 = vmul.f32 %v792, 1.442695
    %v916 = vpow.pop %v915
    %v917 = vmul.f32 %v793, 1.442695
    %v918 = vpow.pop %v917
    %v919 = vmul.f32 %v794, 1.442695
    %v920 = vpow.pop %v919
    %v921 = vmul.f32 %v795, 1.442695
    %v922 = vpow.pop %v921
    %v923 = vmul.f32 %v796, 1.442695
    %v924 = vpow.pop %v923
    %v925 = vadd.f32 %v798, %v800
    %926 = vadd.xlane.f32.xlu0 %v925
    %v927 = vpop.xlane.xlu0 %926
    %v928 = vadd.f32 %v802, %v804
    %929 = vadd.xlane.f32.xlu0 %v928
    %v930 = vpop.xlane.xlu0 %929
    %v931 = vadd.f32 %v806, %v808
    %932 = vadd.xlane.f32.xlu0 %v931
    %v933 = vpop.xlane.xlu0 %932
    %v934 = vadd.f32 %v810, %v812
    %935 = vadd.xlane.f32.xlu0 %v934
    %v936 = vpop.xlane.xlu0 %935
    %v937 = vadd.f32 %v814, %v816
    %938 = vadd.xlane.f32.xlu0 %v937
    %v939 = vpop.xlane.xlu0 %938
    %v940 = vadd.f32 %v818, %v820
    %941 = vadd.xlane.f32.xlu0 %v940
    %v942 = vpop.xlane.xlu0 %941
    %v943 = vadd.f32 %v822, %v824
    %944 = vadd.xlane.f32.xlu0 %v943
    %v945 = vpop.xlane.xlu0 %944
    %v946 = vadd.f32 %v826, %v828
    %947 = vadd.xlane.f32.xlu0 %v946
    %v948 = vpop.xlane.xlu0 %947
    %v949 = vadd.f32 %v830, %v832
    %950 = vadd.xlane.f32.xlu0 %v949
    %v951 = vpop.xlane.xlu0 %950
    %v952 = vadd.f32 %v834, %v836
    %953 = vadd.xlane.f32.xlu0 %v952
    %v954 = vpop.xlane.xlu0 %953
    %v955 = vadd.f32 %v838, %v840
    %956 = vadd.xlane.f32.xlu0 %v955
    %v957 = vpop.xlane.xlu0 %956
    %v958 = vadd.f32 %v842, %v844
    %959 = vadd.xlane.f32.xlu0 %v958
    %v960 = vpop.xlane.xlu0 %959
    %v961 = vadd.f32 %v846, %v848
    %962 = vadd.xlane.f32.xlu0 %v961
    %v963 = vpop.xlane.xlu0 %962
    %v964 = vadd.f32 %v850, %v852
    %965 = vadd.xlane.f32.xlu0 %v964
    %v966 = vpop.xlane.xlu0 %965
    %v967 = vadd.f32 %v854, %v856
    %968 = vadd.xlane.f32.xlu0 %v967
    %v969 = vpop.xlane.xlu0 %968
    %v970 = vadd.f32 %v858, %v860
    %971 = vadd.xlane.f32.xlu0 %v970
    %v972 = vpop.xlane.xlu0 %971
    %v973 = vadd.f32 %v862, %v864
    %974 = vadd.xlane.f32.xlu0 %v973
    %v975 = vpop.xlane.xlu0 %974
    %v976 = vadd.f32 %v866, %v868
    %977 = vadd.xlane.f32.xlu0 %v976
    %v978 = vpop.xlane.xlu0 %977
    %v979 = vadd.f32 %v870, %v872
    %980 = vadd.xlane.f32.xlu0 %v979
    %v981 = vpop.xlane.xlu0 %980
    %v982 = vadd.f32 %v874, %v876
    %983 = vadd.xlane.f32.xlu0 %v982
    %v984 = vpop.xlane.xlu0 %983
    %v985 = vadd.f32 %v878, %v880
    %986 = vadd.xlane.f32.xlu0 %v985
    %v987 = vpop.xlane.xlu0 %986
    %v988 = vadd.f32 %v882, %v884
    %989 = vadd.xlane.f32.xlu0 %v988
    %v990 = vpop.xlane.xlu0 %989
    %v991 = vadd.f32 %v886, %v888
    %992 = vadd.xlane.f32.xlu0 %v991
    %v993 = vpop.xlane.xlu0 %992
    %v994 = vadd.f32 %v890, %v892
    %995 = vadd.xlane.f32.xlu0 %v994
    %v996 = vpop.xlane.xlu0 %995
    %v997 = vadd.f32 %v894, %v896
    %998 = vadd.xlane.f32.xlu0 %v997
    %v999 = vpop.xlane.xlu0 %998
    %v1000 = vadd.f32 %v898, %v900
    %1001 = vadd.xlane.f32.xlu0 %v1000
    %v1002 = vpop.xlane.xlu0 %1001
    %v1003 = vadd.f32 %v902, %v904
    %1004 = vadd.xlane.f32.xlu0 %v1003
    %v1005 = vpop.xlane.xlu0 %1004
    %v1006 = vadd.f32 %v906, %v908
    %1007 = vadd.xlane.f32.xlu0 %v1006
    %v1008 = vpop.xlane.xlu0 %1007
    %v1009 = vadd.f32 %v910, %v912
    %1010 = vadd.xlane.f32.xlu0 %v1009
    %v1011 = vpop.xlane.xlu0 %1010
    %v1012 = vadd.f32 %v914, %v916
    %1013 = vadd.xlane.f32.xlu0 %v1012
    %v1014 = vpop.xlane.xlu0 %1013
    %v1015 = vadd.f32 %v918, %v920
    %1016 = vadd.xlane.f32.xlu0 %v1015
    %v1017 = vpop.xlane.xlu0 %1016
    %v1018 = vadd.f32 %v922, %v924
    %1019 = vadd.xlane.f32.xlu0 %v1018
    %v1020 = vpop.xlane.xlu0 %1019
    %v1021 = vadd.f32 %v798, %v802
    %v1022 = vadd.f32 %v1021, %v806
    %v1023 = vadd.f32 %v1022, %v810
    %v1024 = vadd.f32 %v1023, %v814
    %v1025 = vadd.f32 %v1024, %v818
    %v1026 = vadd.f32 %v1025, %v822
    %v1027 = vadd.f32 %v1026, %v826
    %v1028 = vadd.f32 %v1027, %v830
    %v1029 = vadd.f32 %v1028, %v834
    %v1030 = vadd.f32 %v1029, %v838
    %v1031 = vadd.f32 %v1030, %v842
    %v1032 = vadd.f32 %v1031, %v846
    %v1033 = vadd.f32 %v1032, %v850
    %v1034 = vadd.f32 %v1033, %v854
    %v1035 = vadd.f32 %v1034, %v858
    %v1036 = vadd.f32 %v1035, %v862
    %v1037 = vadd.f32 %v1036, %v866
    %v1038 = vadd.f32 %v1037, %v870
    %v1039 = vadd.f32 %v1038, %v874
    %v1040 = vadd.f32 %v1039, %v878
    %v1041 = vadd.f32 %v1040, %v882
    %v1042 = vadd.f32 %v1041, %v886
    %v1043 = vadd.f32 %v1042, %v890
    %v1044 = vadd.f32 %v1043, %v894
    %v1045 = vadd.f32 %v1044, %v898
    %v1046 = vadd.f32 %v1045, %v902
    %v1047 = vadd.f32 %v1046, %v906
    %v1048 = vadd.f32 %v1047, %v910
    %v1049 = vadd.f32 %v1048, %v914
    %v1050 = vadd.f32 %v1049, %v918
    %v1051 = vadd.f32 %v1050, %v922
    %v1052 = vrot.slane %v1051, 4
    %v1053 = vadd.f32 %v1051, %v1052
    %v1054 = vrot.slane %v1053, 2
    %v1055 = vadd.f32 %v1053, %v1054
    %v1056 = vrot.slane %v1055, 1
    %v1057 = vadd.f32 %v1055, %v1056
    %v1058 = vadd.f32 %v800, %v804
    %v1059 = vadd.f32 %v1058, %v808
    %v1060 = vadd.f32 %v1059, %v812
    %v1061 = vadd.f32 %v1060, %v816
    %v1062 = vadd.f32 %v1061, %v820
    %v1063 = vadd.f32 %v1062, %v824
    %v1064 = vadd.f32 %v1063, %v828
    %v1065 = vadd.f32 %v1064, %v832
    %v1066 = vadd.f32 %v1065, %v836
    %v1067 = vadd.f32 %v1066, %v840
    %v1068 = vadd.f32 %v1067, %v844
    %v1069 = vadd.f32 %v1068, %v848
    %v1070 = vadd.f32 %v1069, %v852
    %v1071 = vadd.f32 %v1070, %v856
    %v1072 = vadd.f32 %v1071, %v860
    %v1073 = vadd.f32 %v1072, %v864
    %v1074 = vadd.f32 %v1073, %v868
    %v1075 = vadd.f32 %v1074, %v872
    %v1076 = vadd.f32 %v1075, %v876
    %v1077 = vadd.f32 %v1076, %v880
    %v1078 = vadd.f32 %v1077, %v884
    %v1079 = vadd.f32 %v1078, %v888
    %v1080 = vadd.f32 %v1079, %v892
    %v1081 = vadd.f32 %v1080, %v896
    %v1082 = vadd.f32 %v1081, %v900
    %v1083 = vadd.f32 %v1082, %v904
    %v1084 = vadd.f32 %v1083, %v908
    %v1085 = vadd.f32 %v1084, %v912
    %v1086 = vadd.f32 %v1085, %v916
    %v1087 = vadd.f32 %v1086, %v920
    %v1088 = vadd.f32 %v1087, %v924
    %v1089 = vrot.slane %v1088, 4
    %v1090 = vadd.f32 %v1088, %v1089
    %v1091 = vrot.slane %v1090, 2
    %v1092 = vadd.f32 %v1090, %v1091
    %v1093 = vrot.slane %v1092, 1
    %v1094 = vadd.f32 %v1092, %v1093
    %v1095 = vld [vmem:[#allocation2] sm:$0xff]
    %v1096 = vld [vmem:[#allocation2 + $0x8] sm:$0xff]
    %v1097 = vld [vmem:[#allocation2 + $0x10] sm:$0xff]
    %v1098 = vld [vmem:[#allocation2 + $0x18] sm:$0xff]
    %v1099 = vld [vmem:[#allocation2 + $0x20] sm:$0xff]
    %v1100 = vld [vmem:[#allocation2 + $0x28] sm:$0xff]
    %v1101 = vld [vmem:[#allocation2 + $0x30] sm:$0xff]
    %v1102 = vld [vmem:[#allocation2 + $0x38] sm:$0xff]
    %v1103 = vld [vmem:[#allocation2 + $0x40] sm:$0xff]
    %v1104 = vld [vmem:[#allocation2 + $0x48] sm:$0xff]
    %v1105 = vld [vmem:[#allocation2 + $0x50] sm:$0xff]
    %v1106 = vld [vmem:[#allocation2 + $0x58] sm:$0xff]
    %v1107 = vld [vmem:[#allocation2 + $0x60] sm:$0xff]
    %v1108 = vld [vmem:[#allocation2 + $0x68] sm:$0xff]
    %v1109 = vld [vmem:[#allocation2 + $0x70] sm:$0xff]
    %v1110 = vld [vmem:[#allocation2 + $0x78] sm:$0xff]
    %v1111 = vld [vmem:[#allocation2 + $0x80] sm:$0xff]
    %v1112 = vld [vmem:[#allocation2 + $0x88] sm:$0xff]
    %v1113 = vld [vmem:[#allocation2 + $0x90] sm:$0xff]
    %v1114 = vld [vmem:[#allocation2 + $0x98] sm:$0xff]
    %v1115 = vld [vmem:[#allocation2 + $0xa0] sm:$0xff]
    %v1116 = vld [vmem:[#allocation2 + $0xa8] sm:$0xff]
    %v1117 = vld [vmem:[#allocation2 + $0xb0] sm:$0xff]
    %v1118 = vld [vmem:[#allocation2 + $0xb8] sm:$0xff]
    %v1119 = vld [vmem:[#allocation2 + $0xc0] sm:$0xff]
    %v1120 = vld [vmem:[#allocation2 + $0xc8] sm:$0xff]
    %v1121 = vld [vmem:[#allocation2 + $0xd0] sm:$0xff]
    %v1122 = vld [vmem:[#allocation2 + $0xd8] sm:$0xff]
    %v1123 = vld [vmem:[#allocation2 + $0xe0] sm:$0xff]
    %v1124 = vld [vmem:[#allocation2 + $0xe8] sm:$0xff]
    %v1125 = vld [vmem:[#allocation2 + $0xf0] sm:$0xff]
    %v1126 = vld [vmem:[#allocation2 + $0xf8] sm:$0xff]
    %v1127 = vmax.f32 %v1095, %v732
    %v1128 = vmax.f32 %v1096, %v732
    %v1129 = vmax.f32 %v1097, %v732
    %v1130 = vmax.f32 %v1098, %v732
    %v1131 = vmax.f32 %v1099, %v732
    %v1132 = vmax.f32 %v1100, %v732
    %v1133 = vmax.f32 %v1101, %v732
    %v1134 = vmax.f32 %v1102, %v732
    %v1135 = vmax.f32 %v1103, %v732
    %v1136 = vmax.f32 %v1104, %v732
    %v1137 = vmax.f32 %v1105, %v732
    %v1138 = vmax.f32 %v1106, %v732
    %v1139 = vmax.f32 %v1107, %v732
    %v1140 = vmax.f32 %v1108, %v732
    %v1141 = vmax.f32 %v1109, %v732
    %v1142 = vmax.f32 %v1110, %v732
    %v1143 = vmax.f32 %v1111, %v732
    %v1144 = vmax.f32 %v1112, %v732
    %v1145 = vmax.f32 %v1113, %v732
    %v1146 = vmax.f32 %v1114, %v732
    %v1147 = vmax.f32 %v1115, %v732
    %v1148 = vmax.f32 %v1116, %v732
    %v1149 = vmax.f32 %v1117, %v732
    %v1150 = vmax.f32 %v1118, %v732
    %v1151 = vmax.f32 %v1119, %v732
    %v1152 = vmax.f32 %v1120, %v732
    %v1153 = vmax.f32 %v1121, %v732
    %v1154 = vmax.f32 %v1122, %v732
    %v1155 = vmax.f32 %v1123, %v732
    %v1156 = vmax.f32 %v1124, %v732
    %v1157 = vmax.f32 %v1125, %v732
    %v1158 = vmax.f32 %v1126, %v732
    %v1159 = vld [vmem:[#allocation3] sm:$0xff]
    %v1160 = vld [vmem:[#allocation3 + $0x8] sm:$0xff]
    %v1161 = vld [vmem:[#allocation3 + $0x10] sm:$0xff]
    %v1162 = vld [vmem:[#allocation3 + $0x18] sm:$0xff]
    %v1163 = vld [vmem:[#allocation3 + $0x20] sm:$0xff]
    %v1164 = vld [vmem:[#allocation3 + $0x28] sm:$0xff]
    %v1165 = vld [vmem:[#allocation3 + $0x30] sm:$0xff]
    %v1166 = vld [vmem:[#allocation3 + $0x38] sm:$0xff]
    %v1167 = vld [vmem:[#allocation3 + $0x40] sm:$0xff]
    %v1168 = vld [vmem:[#allocation3 + $0x48] sm:$0xff]
    %v1169 = vld [vmem:[#allocation3 + $0x50] sm:$0xff]
    %v1170 = vld [vmem:[#allocation3 + $0x58] sm:$0xff]
    %v1171 = vld [vmem:[#allocation3 + $0x60] sm:$0xff]
    %v1172 = vld [vmem:[#allocation3 + $0x68] sm:$0xff]
    %v1173 = vld [vmem:[#allocation3 + $0x70] sm:$0xff]
    %v1174 = vld [vmem:[#allocation3 + $0x78] sm:$0xff]
    %v1175 = vld [vmem:[#allocation3 + $0x80] sm:$0xff]
    %v1176 = vld [vmem:[#allocation3 + $0x88] sm:$0xff]
    %v1177 = vld [vmem:[#allocation3 + $0x90] sm:$0xff]
    %v1178 = vld [vmem:[#allocation3 + $0x98] sm:$0xff]
    %v1179 = vld [vmem:[#allocation3 + $0xa0] sm:$0xff]
    %v1180 = vld [vmem:[#allocation3 + $0xa8] sm:$0xff]
    %v1181 = vld [vmem:[#allocation3 + $0xb0] sm:$0xff]
    %v1182 = vld [vmem:[#allocation3 + $0xb8] sm:$0xff]
    %v1183 = vld [vmem:[#allocation3 + $0xc0] sm:$0xff]
    %v1184 = vld [vmem:[#allocation3 + $0xc8] sm:$0xff]
    %v1185 = vld [vmem:[#allocation3 + $0xd0] sm:$0xff]
    %v1186 = vld [vmem:[#allocation3 + $0xd8] sm:$0xff]
    %v1187 = vld [vmem:[#allocation3 + $0xe0] sm:$0xff]
    %v1188 = vld [vmem:[#allocation3 + $0xe8] sm:$0xff]
    %v1189 = vld [vmem:[#allocation3 + $0xf0] sm:$0xff]
    %v1190 = vld [vmem:[#allocation3 + $0xf8] sm:$0xff]
    %v1191 = vsub.f32 %v1095, %v1127
    %v1192 = vsub.f32 %v1096, %v1128
    %v1193 = vsub.f32 %v1097, %v1129
    %v1194 = vsub.f32 %v1098, %v1130
    %v1195 = vsub.f32 %v1099, %v1131
    %v1196 = vsub.f32 %v1100, %v1132
    %v1197 = vsub.f32 %v1101, %v1133
    %v1198 = vsub.f32 %v1102, %v1134
    %v1199 = vsub.f32 %v1103, %v1135
    %v1200 = vsub.f32 %v1104, %v1136
    %v1201 = vsub.f32 %v1105, %v1137
    %v1202 = vsub.f32 %v1106, %v1138
    %v1203 = vsub.f32 %v1107, %v1139
    %v1204 = vsub.f32 %v1108, %v1140
    %v1205 = vsub.f32 %v1109, %v1141
    %v1206 = vsub.f32 %v1110, %v1142
    %v1207 = vsub.f32 %v1111, %v1143
    %v1208 = vsub.f32 %v1112, %v1144
    %v1209 = vsub.f32 %v1113, %v1145
    %v1210 = vsub.f32 %v1114, %v1146
    %v1211 = vsub.f32 %v1115, %v1147
    %v1212 = vsub.f32 %v1116, %v1148
    %v1213 = vsub.f32 %v1117, %v1149
    %v1214 = vsub.f32 %v1118, %v1150
    %v1215 = vsub.f32 %v1119, %v1151
    %v1216 = vsub.f32 %v1120, %v1152
    %v1217 = vsub.f32 %v1121, %v1153
    %v1218 = vsub.f32 %v1122, %v1154
    %v1219 = vsub.f32 %v1123, %v1155
    %v1220 = vsub.f32 %v1124, %v1156
    %v1221 = vsub.f32 %v1125, %v1157
    %v1222 = vsub.f32 %v1126, %v1158
    %v1223 = vmul.f32 %v1191, 1.442695
    %v1224 = vpow.pop %v1223
    %v1225 = vmul.f32 %v1192, 1.442695
    %v1226 = vpow.pop %v1225
    %v1227 = vmul.f32 %v1193, 1.442695
    %v1228 = vpow.pop %v1227
    %v1229 = vmul.f32 %v1194, 1.442695
    %v1230 = vpow.pop %v1229
    %v1231 = vmul.f32 %v1195, 1.442695
    %v1232 = vpow.pop %v1231
    %v1233 = vmul.f32 %v1196, 1.442695
    %v1234 = vpow.pop %v1233
    %v1235 = vmul.f32 %v1197, 1.442695
    %v1236 = vpow.pop %v1235
    %v1237 = vmul.f32 %v1198, 1.442695
    %v1238 = vpow.pop %v1237
    %v1239 = vmul.f32 %v1199, 1.442695
    %v1240 = vpow.pop %v1239
    %v1241 = vmul.f32 %v1200, 1.442695
    %v1242 = vpow.pop %v1241
    %v1243 = vmul.f32 %v1201, 1.442695
    %v1244 = vpow.pop %v1243
    %v1245 = vmul.f32 %v1202, 1.442695
    %v1246 = vpow.pop %v1245
    %v1247 = vmul.f32 %v1203, 1.442695
    %v1248 = vpow.pop %v1247
    %v1249 = vmul.f32 %v1204, 1.442695
    %v1250 = vpow.pop %v1249
    %v1251 = vmul.f32 %v1205, 1.442695
    %v1252 = vpow.pop %v1251
    %v1253 = vmul.f32 %v1206, 1.442695
    %v1254 = vpow.pop %v1253
    %v1255 = vmul.f32 %v1207, 1.442695
    %v1256 = vpow.pop %v1255
    %v1257 = vmul.f32 %v1208, 1.442695
    %v1258 = vpow.pop %v1257
    %v1259 = vmul.f32 %v1209, 1.442695
    %v1260 = vpow.pop %v1259
    %v1261 = vmul.f32 %v1210, 1.442695
    %v1262 = vpow.pop %v1261
    %v1263 = vmul.f32 %v1211, 1.442695
    %v1264 = vpow.pop %v1263
    %v1265 = vmul.f32 %v1212, 1.442695
    %v1266 = vpow.pop %v1265
    %v1267 = vmul.f32 %v1213, 1.442695
    %v1268 = vpow.pop %v1267
    %v1269 = vmul.f32 %v1214, 1.442695
    %v1270 = vpow.pop %v1269
    %v1271 = vmul.f32 %v1215, 1.442695
    %v1272 = vpow.pop %v1271
    %v1273 = vmul.f32 %v1216, 1.442695
    %v1274 = vpow.pop %v1273
    %v1275 = vmul.f32 %v1217, 1.442695
    %v1276 = vpow.pop %v1275
    %v1277 = vmul.f32 %v1218, 1.442695
    %v1278 = vpow.pop %v1277
    %v1279 = vmul.f32 %v1219, 1.442695
    %v1280 = vpow.pop %v1279
    %v1281 = vmul.f32 %v1220, 1.442695
    %v1282 = vpow.pop %v1281
    %v1283 = vmul.f32 %v1221, 1.442695
    %v1284 = vpow.pop %v1283
    %v1285 = vmul.f32 %v1222, 1.442695
    %v1286 = vpow.pop %v1285
    %v1287 = vmul.f32 %v1159, %v1224
    %v1288 = vmul.f32 %v1160, %v1226
    %v1289 = vmul.f32 %v1161, %v1228
    %v1290 = vmul.f32 %v1162, %v1230
    %v1291 = vmul.f32 %v1163, %v1232
    %v1292 = vmul.f32 %v1164, %v1234
    %v1293 = vmul.f32 %v1165, %v1236
    %v1294 = vmul.f32 %v1166, %v1238
    %v1295 = vmul.f32 %v1167, %v1240
    %v1296 = vmul.f32 %v1168, %v1242
    %v1297 = vmul.f32 %v1169, %v1244
    %v1298 = vmul.f32 %v1170, %v1246
    %v1299 = vmul.f32 %v1171, %v1248
    %v1300 = vmul.f32 %v1172, %v1250
    %v1301 = vmul.f32 %v1173, %v1252
    %v1302 = vmul.f32 %v1174, %v1254
    %v1303 = vmul.f32 %v1175, %v1256
    %v1304 = vmul.f32 %v1176, %v1258
    %v1305 = vmul.f32 %v1177, %v1260
    %v1306 = vmul.f32 %v1178, %v1262
    %v1307 = vmul.f32 %v1179, %v1264
    %v1308 = vmul.f32 %v1180, %v1266
    %v1309 = vmul.f32 %v1181, %v1268
    %v1310 = vmul.f32 %v1182, %v1270
    %v1311 = vmul.f32 %v1183, %v1272
    %v1312 = vmul.f32 %v1184, %v1274
    %v1313 = vmul.f32 %v1185, %v1276
    %v1314 = vmul.f32 %v1186, %v1278
    %v1315 = vmul.f32 %v1187, %v1280
    %v1316 = vmul.f32 %v1188, %v1282
    %v1317 = vmul.f32 %v1189, %v1284
    %v1318 = vmul.f32 %v1190, %v1286
    %v1319 = vsub.f32 %v732, %v1127
    %v1320 = vsub.f32 %v732, %v1128
    %v1321 = vsub.f32 %v732, %v1129
    %v1322 = vsub.f32 %v732, %v1130
    %v1323 = vsub.f32 %v732, %v1131
    %v1324 = vsub.f32 %v732, %v1132
    %v1325 = vsub.f32 %v732, %v1133
    %v1326 = vsub.f32 %v732, %v1134
    %v1327 = vsub.f32 %v732, %v1135
    %v1328 = vsub.f32 %v732, %v1136
    %v1329 = vsub.f32 %v732, %v1137
    %v1330 = vsub.f32 %v732, %v1138
    %v1331 = vsub.f32 %v732, %v1139
    %v1332 = vsub.f32 %v732, %v1140
    %v1333 = vsub.f32 %v732, %v1141
    %v1334 = vsub.f32 %v732, %v1142
    %v1335 = vsub.f32 %v732, %v1143
    %v1336 = vsub.f32 %v732, %v1144
    %v1337 = vsub.f32 %v732, %v1145
    %v1338 = vsub.f32 %v732, %v1146
    %v1339 = vsub.f32 %v732, %v1147
    %v1340 = vsub.f32 %v732, %v1148
    %v1341 = vsub.f32 %v732, %v1149
    %v1342 = vsub.f32 %v732, %v1150
    %v1343 = vsub.f32 %v732, %v1151
    %v1344 = vsub.f32 %v732, %v1152
    %v1345 = vsub.f32 %v732, %v1153
    %v1346 = vsub.f32 %v732, %v1154
    %v1347 = vsub.f32 %v732, %v1155
    %v1348 = vsub.f32 %v732, %v1156
    %v1349 = vsub.f32 %v732, %v1157
    %v1350 = vsub.f32 %v732, %v1158
    %v1351 = vmul.f32 %v1319, 1.442695
    %v1352 = vpow.pop %v1351
    %v1353 = vmul.f32 %v1320, 1.442695
    %v1354 = vpow.pop %v1353
    %v1355 = vmul.f32 %v1321, 1.442695
    %v1356 = vpow.pop %v1355
    %v1357 = vmul.f32 %v1322, 1.442695
    %v1358 = vpow.pop %v1357
    %v1359 = vmul.f32 %v1323, 1.442695
    %v1360 = vpow.pop %v1359
    %v1361 = vmul.f32 %v1324, 1.442695
    %v1362 = vpow.pop %v1361
    %v1363 = vmul.f32 %v1325, 1.442695
    %v1364 = vpow.pop %v1363
    %v1365 = vmul.f32 %v1326, 1.442695
    %v1366 = vpow.pop %v1365
    %v1367 = vmul.f32 %v1327, 1.442695
    %v1368 = vpow.pop %v1367
    %v1369 = vmul.f32 %v1328, 1.442695
    %v1370 = vpow.pop %v1369
    %v1371 = vmul.f32 %v1329, 1.442695
    %v1372 = vpow.pop %v1371
    %v1373 = vmul.f32 %v1330, 1.442695
    %v1374 = vpow.pop %v1373
    %v1375 = vmul.f32 %v1331, 1.442695
    %v1376 = vpow.pop %v1375
    %v1377 = vmul.f32 %v1332, 1.442695
    %v1378 = vpow.pop %v1377
    %v1379 = vmul.f32 %v1333, 1.442695
    %v1380 = vpow.pop %v1379
    %v1381 = vmul.f32 %v1334, 1.442695
    %v1382 = vpow.pop %v1381
    %v1383 = vmul.f32 %v1335, 1.442695
    %v1384 = vpow.pop %v1383
    %v1385 = vmul.f32 %v1336, 1.442695
    %v1386 = vpow.pop %v1385
    %v1387 = vmul.f32 %v1337, 1.442695
    %v1388 = vpow.pop %v1387
    %v1389 = vmul.f32 %v1338, 1.442695
    %v1390 = vpow.pop %v1389
    %v1391 = vmul.f32 %v1339, 1.442695
    %v1392 = vpow.pop %v1391
    %v1393 = vmul.f32 %v1340, 1.442695
    %v1394 = vpow.pop %v1393
    %v1395 = vmul.f32 %v1341, 1.442695
    %v1396 = vpow.pop %v1395
    %v1397 = vmul.f32 %v1342, 1.442695
    %v1398 = vpow.pop %v1397
    %v1399 = vmul.f32 %v1343, 1.442695
    %v1400 = vpow.pop %v1399
    %v1401 = vmul.f32 %v1344, 1.442695
    %v1402 = vpow.pop %v1401
    %v1403 = vmul.f32 %v1345, 1.442695
    %v1404 = vpow.pop %v1403
    %v1405 = vmul.f32 %v1346, 1.442695
    %v1406 = vpow.pop %v1405
    %v1407 = vmul.f32 %v1347, 1.442695
    %v1408 = vpow.pop %v1407
    %v1409 = vmul.f32 %v1348, 1.442695
    %v1410 = vpow.pop %v1409
    %v1411 = vmul.f32 %v1349, 1.442695
    %v1412 = vpow.pop %v1411
    %v1413 = vmul.f32 %v1350, 1.442695
    %v1414 = vpow.pop %v1413
    %v1415 = vmul.f32 %v927, %v1352
    %v1416 = vmul.f32 %v930, %v1354
    %v1417 = vmul.f32 %v933, %v1356
    %v1418 = vmul.f32 %v936, %v1358
    %v1419 = vmul.f32 %v939, %v1360
    %v1420 = vmul.f32 %v942, %v1362
    %v1421 = vmul.f32 %v945, %v1364
    %v1422 = vmul.f32 %v948, %v1366
    %v1423 = vmul.f32 %v951, %v1368
    %v1424 = vmul.f32 %v954, %v1370
    %v1425 = vmul.f32 %v957, %v1372
    %v1426 = vmul.f32 %v960, %v1374
    %v1427 = vmul.f32 %v963, %v1376
    %v1428 = vmul.f32 %v966, %v1378
    %v1429 = vmul.f32 %v969, %v1380
    %v1430 = vmul.f32 %v972, %v1382
    %v1431 = vmul.f32 %v975, %v1384
    %v1432 = vmul.f32 %v978, %v1386
    %v1433 = vmul.f32 %v981, %v1388
    %v1434 = vmul.f32 %v984, %v1390
    %v1435 = vmul.f32 %v987, %v1392
    %v1436 = vmul.f32 %v990, %v1394
    %v1437 = vmul.f32 %v993, %v1396
    %v1438 = vmul.f32 %v996, %v1398
    %v1439 = vmul.f32 %v999, %v1400
    %v1440 = vmul.f32 %v1002, %v1402
    %v1441 = vmul.f32 %v1005, %v1404
    %v1442 = vmul.f32 %v1008, %v1406
    %v1443 = vmul.f32 %v1011, %v1408
    %v1444 = vmul.f32 %v1014, %v1410
    %v1445 = vmul.f32 %v1017, %v1412
    %v1446 = vmul.f32 %v1020, %v1414
    %v1447 = vadd.f32 %v1287, %v1415
    %v1448 = vadd.f32 %v1288, %v1416
    %v1449 = vadd.f32 %v1289, %v1417
    %v1450 = vadd.f32 %v1290, %v1418
    %v1451 = vadd.f32 %v1291, %v1419
    %v1452 = vadd.f32 %v1292, %v1420
    %v1453 = vadd.f32 %v1293, %v1421
    %v1454 = vadd.f32 %v1294, %v1422
    %v1455 = vadd.f32 %v1295, %v1423
    %v1456 = vadd.f32 %v1296, %v1424
    %v1457 = vadd.f32 %v1297, %v1425
    %v1458 = vadd.f32 %v1298, %v1426
    %v1459 = vadd.f32 %v1299, %v1427
    %v1460 = vadd.f32 %v1300, %v1428
    %v1461 = vadd.f32 %v1301, %v1429
    %v1462 = vadd.f32 %v1302, %v1430
    %v1463 = vadd.f32 %v1303, %v1431
    %v1464 = vadd.f32 %v1304, %v1432
    %v1465 = vadd.f32 %v1305, %v1433
    %v1466 = vadd.f32 %v1306, %v1434
    %v1467 = vadd.f32 %v1307, %v1435
    %v1468 = vadd.f32 %v1308, %v1436
    %v1469 = vadd.f32 %v1309, %v1437
    %v1470 = vadd.f32 %v1310, %v1438
    %v1471 = vadd.f32 %v1311, %v1439
    %v1472 = vadd.f32 %v1312, %v1440
    %v1473 = vadd.f32 %v1313, %v1441
    %v1474 = vadd.f32 %v1314, %v1442
    %v1475 = vadd.f32 %v1315, %v1443
    %v1476 = vadd.f32 %v1316, %v1444
    %v1477 = vadd.f32 %v1317, %v1445
    %v1478 = vadd.f32 %v1318, %v1446
    %vm1479 = vcmask 7168
    %1480 = vst.msk [vmem:[#allocation3] sm:$0xff] %vm1479, %v1447
    %1481 = vst.msk [vmem:[#allocation3 + $0x8] sm:$0xff] %vm1479, %v1448
    %1482 = vst.msk [vmem:[#allocation3 + $0x10] sm:$0xff] %vm1479, %v1449
    %1483 = vst.msk [vmem:[#allocation3 + $0x18] sm:$0xff] %vm1479, %v1450
    %1484 = vst.msk [vmem:[#allocation3 + $0x20] sm:$0xff] %vm1479, %v1451
    %1485 = vst.msk [vmem:[#allocation3 + $0x28] sm:$0xff] %vm1479, %v1452
    %1486 = vst.msk [vmem:[#allocation3 + $0x30] sm:$0xff] %vm1479, %v1453
    %1487 = vst.msk [vmem:[#allocation3 + $0x38] sm:$0xff] %vm1479, %v1454
    %1488 = vst.msk [vmem:[#allocation3 + $0x40] sm:$0xff] %vm1479, %v1455
    %1489 = vst.msk [vmem:[#allocation3 + $0x48] sm:$0xff] %vm1479, %v1456
    %1490 = vst.msk [vmem:[#allocation3 + $0x50] sm:$0xff] %vm1479, %v1457
    %1491 = vst.msk [vmem:[#allocation3 + $0x58] sm:$0xff] %vm1479, %v1458
    %1492 = vst.msk [vmem:[#allocation3 + $0x60] sm:$0xff] %vm1479, %v1459
    %1493 = vst.msk [vmem:[#allocation3 + $0x68] sm:$0xff] %vm1479, %v1460
    %1494 = vst.msk [vmem:[#allocation3 + $0x70] sm:$0xff] %vm1479, %v1461
    %1495 = vst.msk [vmem:[#allocation3 + $0x78] sm:$0xff] %vm1479, %v1462
    %1496 = vst.msk [vmem:[#allocation3 + $0x80] sm:$0xff] %vm1479, %v1463
    %1497 = vst.msk [vmem:[#allocation3 + $0x88] sm:$0xff] %vm1479, %v1464
    %1498 = vst.msk [vmem:[#allocation3 + $0x90] sm:$0xff] %vm1479, %v1465
    %1499 = vst.msk [vmem:[#allocation3 + $0x98] sm:$0xff] %vm1479, %v1466
    %1500 = vst.msk [vmem:[#allocation3 + $0xa0] sm:$0xff] %vm1479, %v1467
    %1501 = vst.msk [vmem:[#allocation3 + $0xa8] sm:$0xff] %vm1479, %v1468
    %1502 = vst.msk [vmem:[#allocation3 + $0xb0] sm:$0xff] %vm1479, %v1469
    %1503 = vst.msk [vmem:[#allocation3 + $0xb8] sm:$0xff] %vm1479, %v1470
    %1504 = vst.msk [vmem:[#allocation3 + $0xc0] sm:$0xff] %vm1479, %v1471
    %1505 = vst.msk [vmem:[#allocation3 + $0xc8] sm:$0xff] %vm1479, %v1472
    %1506 = vst.msk [vmem:[#allocation3 + $0xd0] sm:$0xff] %vm1479, %v1473
    %1507 = vst.msk [vmem:[#allocation3 + $0xd8] sm:$0xff] %vm1479, %v1474
    %1508 = vst.msk [vmem:[#allocation3 + $0xe0] sm:$0xff] %vm1479, %v1475
    %1509 = vst.msk [vmem:[#allocation3 + $0xe8] sm:$0xff] %vm1479, %v1476
    %1510 = vst.msk [vmem:[#allocation3 + $0xf0] sm:$0xff] %vm1479, %v1477
    %1511 = vst.msk [vmem:[#allocation3 + $0xf8] sm:$0xff] %vm1479, %v1478
    %1512 = vst.msk [vmem:[#allocation2] sm:$0xff] %vm1479, %v1127
    %1513 = vst.msk [vmem:[#allocation2 + $0x8] sm:$0xff] %vm1479, %v1128
    %1514 = vst.msk [vmem:[#allocation2 + $0x10] sm:$0xff] %vm1479, %v1129
    %1515 = vst.msk [vmem:[#allocation2 + $0x18] sm:$0xff] %vm1479, %v1130
    %1516 = vst.msk [vmem:[#allocation2 + $0x20] sm:$0xff] %vm1479, %v1131
    %1517 = vst.msk [vmem:[#allocation2 + $0x28] sm:$0xff] %vm1479, %v1132
    %1518 = vst.msk [vmem:[#allocation2 + $0x30] sm:$0xff] %vm1479, %v1133
    %1519 = vst.msk [vmem:[#allocation2 + $0x38] sm:$0xff] %vm1479, %v1134
    %1520 = vst.msk [vmem:[#allocation2 + $0x40] sm:$0xff] %vm1479, %v1135
    %1521 = vst.msk [vmem:[#allocation2 + $0x48] sm:$0xff] %vm1479, %v1136
    %1522 = vst.msk [vmem:[#allocation2 + $0x50] sm:$0xff] %vm1479, %v1137
    %1523 = vst.msk [vmem:[#allocation2 + $0x58] sm:$0xff] %vm1479, %v1138
    %1524 = vst.msk [vmem:[#allocation2 + $0x60] sm:$0xff] %vm1479, %v1139
    %1525 = vst.msk [vmem:[#allocation2 + $0x68] sm:$0xff] %vm1479, %v1140
    %1526 = vst.msk [vmem:[#allocation2 + $0x70] sm:$0xff] %vm1479, %v1141
    %1527 = vst.msk [vmem:[#allocation2 + $0x78] sm:$0xff] %vm1479, %v1142
    %1528 = vst.msk [vmem:[#allocation2 + $0x80] sm:$0xff] %vm1479, %v1143
    %1529 = vst.msk [vmem:[#allocation2 + $0x88] sm:$0xff] %vm1479, %v1144
    %1530 = vst.msk [vmem:[#allocation2 + $0x90] sm:$0xff] %vm1479, %v1145
    %1531 = vst.msk [vmem:[#allocation2 + $0x98] sm:$0xff] %vm1479, %v1146
    %1532 = vst.msk [vmem:[#allocation2 + $0xa0] sm:$0xff] %vm1479, %v1147
    %1533 = vst.msk [vmem:[#allocation2 + $0xa8] sm:$0xff] %vm1479, %v1148
    %1534 = vst.msk [vmem:[#allocation2 + $0xb0] sm:$0xff] %vm1479, %v1149
    %1535 = vst.msk [vmem:[#allocation2 + $0xb8] sm:$0xff] %vm1479, %v1150
    %1536 = vst.msk [vmem:[#allocation2 + $0xc0] sm:$0xff] %vm1479, %v1151
    %1537 = vst.msk [vmem:[#allocation2 + $0xc8] sm:$0xff] %vm1479, %v1152
    %1538 = vst.msk [vmem:[#allocation2 + $0xd0] sm:$0xff] %vm1479, %v1153
    %1539 = vst.msk [vmem:[#allocation2 + $0xd8] sm:$0xff] %vm1479, %v1154
    %1540 = vst.msk [vmem:[#allocation2 + $0xe0] sm:$0xff] %vm1479, %v1155
    %1541 = vst.msk [vmem:[#allocation2 + $0xe8] sm:$0xff] %vm1479, %v1156
    %1542 = vst.msk [vmem:[#allocation2 + $0xf0] sm:$0xff] %vm1479, %v1157
    %1543 = vst.msk [vmem:[#allocation2 + $0xf8] sm:$0xff] %vm1479, %v1158
    %s1544 = smul.u32 0, 2
    %s1545 = scalar_lea.vmem [#allocation4], %s1544
    %v1546 = vlaneseq
    %vm1547 = vcmp.ge.s32.totalorder %v1546, 0
    %vm1548 = vcmp.lt.s32.totalorder %v1546, 256
    %vm1549 = vmand %vm1547, %vm1548
    %1550 = vst.msk [vmem:[%s1545] sm:$0x3] %vm1549, %v732
    %v1553 = vcombine.low %v1057, %v1094
    %v1555 = vunpack.c.l.s4 1966171168
    %v1556 = vunpack.c.0.s8 %v1555
    %v1557 = vlaneseq
    %v1558 = vshrl.u32 %v1557, 7
    %v1559 = vsub.s32 %v1556, %v1558
    %v1560 = vrot.slane %v1553, %v1559
    %v1562 = vunpack.c.l.s4 1966171168
    %v1563 = vunpack.c.0.s8 %v1562
    %v1564 = vlaneseq
    %v1565 = vshrl.u32 %v1564, 7
    %v1566 = vsub.s32 %v1563, %v1565
    %v1567 = vrot.slane %v1560, %v1566
    %s1569 = scalar_lea.vmem [#allocation6], %s1544
    %1570 = vst.msk [vmem:[%s1569] sm:$0x3] %vm1549, %v1567
    // Predicated region
    $region14: #{tpu_custom_call.1} parent=1 // pred_check
      %p1571 = pneg %p17
    $region15: #{tpu_custom_call.1} parent=1 // pred_check_branch
      %1573 = sbr.rel (%p1571) target = $region17
    $region16: #{tpu_custom_call.1} parent=1 // pred_region
      %v1574 = vld [vmem:[#allocation3] sm:$0xff]
      %v1575 = vld [vmem:[#allocation3 + $0x8] sm:$0xff]
      %v1576 = vld [vmem:[#allocation3 + $0x10] sm:$0xff]
      %v1577 = vld [vmem:[#allocation3 + $0x18] sm:$0xff]
      %v1578 = vld [vmem:[#allocation3 + $0x20] sm:$0xff]
      %v1579 = vld [vmem:[#allocation3 + $0x28] sm:$0xff]
      %v1580 = vld [vmem:[#allocation3 + $0x30] sm:$0xff]
      %v1581 = vld [vmem:[#allocation3 + $0x38] sm:$0xff]
      %v1582 = vld [vmem:[#allocation3 + $0x40] sm:$0xff]
      %v1583 = vld [vmem:[#allocation3 + $0x48] sm:$0xff]
      %v1584 = vld [vmem:[#allocation3 + $0x50] sm:$0xff]
      %v1585 = vld [vmem:[#allocation3 + $0x58] sm:$0xff]
      %v1586 = vld [vmem:[#allocation3 + $0x60] sm:$0xff]
      %v1587 = vld [vmem:[#allocation3 + $0x68] sm:$0xff]
      %v1588 = vld [vmem:[#allocation3 + $0x70] sm:$0xff]
      %v1589 = vld [vmem:[#allocation3 + $0x78] sm:$0xff]
      %v1590 = vld [vmem:[#allocation3 + $0x80] sm:$0xff]
      %v1591 = vld [vmem:[#allocation3 + $0x88] sm:$0xff]
      %v1592 = vld [vmem:[#allocation3 + $0x90] sm:$0xff]
      %v1593 = vld [vmem:[#allocation3 + $0x98] sm:$0xff]
      %v1594 = vld [vmem:[#allocation3 + $0xa0] sm:$0xff]
      %v1595 = vld [vmem:[#allocation3 + $0xa8] sm:$0xff]
      %v1596 = vld [vmem:[#allocation3 + $0xb0] sm:$0xff]
      %v1597 = vld [vmem:[#allocation3 + $0xb8] sm:$0xff]
      %v1598 = vld [vmem:[#allocation3 + $0xc0] sm:$0xff]
      %v1599 = vld [vmem:[#allocation3 + $0xc8] sm:$0xff]
      %v1600 = vld [vmem:[#allocation3 + $0xd0] sm:$0xff]
      %v1601 = vld [vmem:[#allocation3 + $0xd8] sm:$0xff]
      %v1602 = vld [vmem:[#allocation3 + $0xe0] sm:$0xff]
      %v1603 = vld [vmem:[#allocation3 + $0xe8] sm:$0xff]
      %v1604 = vld [vmem:[#allocation3 + $0xf0] sm:$0xff]
      %v1605 = vld [vmem:[#allocation3 + $0xf8] sm:$0xff]
      %v1606 = vlog2.pop %v1574
      %v1607 = vmul.f32 %v1606, 0.6931472
      %v1608 = vlog2.pop %v1575
      %v1609 = vmul.f32 %v1608, 0.6931472
      %v1610 = vlog2.pop %v1576
      %v1611 = vmul.f32 %v1610, 0.6931472
      %v1612 = vlog2.pop %v1577
      %v1613 = vmul.f32 %v1612, 0.6931472
      %v1614 = vlog2.pop %v1578
      %v1615 = vmul.f32 %v1614, 0.6931472
      %v1616 = vlog2.pop %v1579
      %v1617 = vmul.f32 %v1616, 0.6931472
      %v1618 = vlog2.pop %v1580
      %v1619 = vmul.f32 %v1618, 0.6931472
      %v1620 = vlog2.pop %v1581
      %v1621 = vmul.f32 %v1620, 0.6931472
      %v1622 = vlog2.pop %v1582
      %v1623 = vmul.f32 %v1622, 0.6931472
      %v1624 = vlog2.pop %v1583
      %v1625 = vmul.f32 %v1624, 0.6931472
      %v1626 = vlog2.pop %v1584
      %v1627 = vmul.f32 %v1626, 0.6931472
      %v1628 = vlog2.pop %v1585
      %v1629 = vmul.f32 %v1628, 0.6931472
      %v1630 = vlog2.pop %v1586
      %v1631 = vmul.f32 %v1630, 0.6931472
      %v1632 = vlog2.pop %v1587
      %v1633 = vmul.f32 %v1632, 0.6931472
      %v1634 = vlog2.pop %v1588
      %v1635 = vmul.f32 %v1634, 0.6931472
      %v1636 = vlog2.pop %v1589
      %v1637 = vmul.f32 %v1636, 0.6931472
      %v1638 = vlog2.pop %v1590
      %v1639 = vmul.f32 %v1638, 0.6931472
      %v1640 = vlog2.pop %v1591
      %v1641 = vmul.f32 %v1640, 0.6931472
      %v1642 = vlog2.pop %v1592
      %v1643 = vmul.f32 %v1642, 0.6931472
      %v1644 = vlog2.pop %v1593
      %v1645 = vmul.f32 %v1644, 0.6931472
      %v1646 = vlog2.pop %v1594
      %v1647 = vmul.f32 %v1646, 0.6931472
      %v1648 = vlog2.pop %v1595
      %v1649 = vmul.f32 %v1648, 0.6931472
      %v1650 = vlog2.pop %v1596
      %v1651 = vmul.f32 %v1650, 0.6931472
      %v1652 = vlog2.pop %v1597
      %v1653 = vmul.f32 %v1652, 0.6931472
      %v1654 = vlog2.pop %v1598
      %v1655 = vmul.f32 %v1654, 0.6931472
      %v1656 = vlog2.pop %v1599
      %v1657 = vmul.f32 %v1656, 0.6931472
      %v1658 = vlog2.pop %v1600
      %v1659 = vmul.f32 %v1658, 0.6931472
      %v1660 = vlog2.pop %v1601
      %v1661 = vmul.f32 %v1660, 0.6931472
      %v1662 = vlog2.pop %v1602
      %v1663 = vmul.f32 %v1662, 0.6931472
      %v1664 = vlog2.pop %v1603
      %v1665 = vmul.f32 %v1664, 0.6931472
      %v1666 = vlog2.pop %v1604
      %v1667 = vmul.f32 %v1666, 0.6931472
      %v1668 = vlog2.pop %v1605
      %v1669 = vmul.f32 %v1668, 0.6931472
      %v1670 = vld [vmem:[#allocation2] sm:$0xff]
      %v1671 = vld [vmem:[#allocation2 + $0x8] sm:$0xff]
      %v1672 = vld [vmem:[#allocation2 + $0x10] sm:$0xff]
      %v1673 = vld [vmem:[#allocation2 + $0x18] sm:$0xff]
      %v1674 = vld [vmem:[#allocation2 + $0x20] sm:$0xff]
      %v1675 = vld [vmem:[#allocation2 + $0x28] sm:$0xff]
      %v1676 = vld [vmem:[#allocation2 + $0x30] sm:$0xff]
      %v1677 = vld [vmem:[#allocation2 + $0x38] sm:$0xff]
      %v1678 = vld [vmem:[#allocation2 + $0x40] sm:$0xff]
      %v1679 = vld [vmem:[#allocation2 + $0x48] sm:$0xff]
      %v1680 = vld [vmem:[#allocation2 + $0x50] sm:$0xff]
      %v1681 = vld [vmem:[#allocation2 + $0x58] sm:$0xff]
      %v1682 = vld [vmem:[#allocation2 + $0x60] sm:$0xff]
      %v1683 = vld [vmem:[#allocation2 + $0x68] sm:$0xff]
      %v1684 = vld [vmem:[#allocation2 + $0x70] sm:$0xff]
      %v1685 = vld [vmem:[#allocation2 + $0x78] sm:$0xff]
      %v1686 = vld [vmem:[#allocation2 + $0x80] sm:$0xff]
      %v1687 = vld [vmem:[#allocation2 + $0x88] sm:$0xff]
      %v1688 = vld [vmem:[#allocation2 + $0x90] sm:$0xff]
      %v1689 = vld [vmem:[#allocation2 + $0x98] sm:$0xff]
      %v1690 = vld [vmem:[#allocation2 + $0xa0] sm:$0xff]
      %v1691 = vld [vmem:[#allocation2 + $0xa8] sm:$0xff]
      %v1692 = vld [vmem:[#allocation2 + $0xb0] sm:$0xff]
      %v1693 = vld [vmem:[#allocation2 + $0xb8] sm:$0xff]
      %v1694 = vld [vmem:[#allocation2 + $0xc0] sm:$0xff]
      %v1695 = vld [vmem:[#allocation2 + $0xc8] sm:$0xff]
      %v1696 = vld [vmem:[#allocation2 + $0xd0] sm:$0xff]
      %v1697 = vld [vmem:[#allocation2 + $0xd8] sm:$0xff]
      %v1698 = vld [vmem:[#allocation2 + $0xe0] sm:$0xff]
      %v1699 = vld [vmem:[#allocation2 + $0xe8] sm:$0xff]
      %v1700 = vld [vmem:[#allocation2 + $0xf0] sm:$0xff]
      %v1701 = vld [vmem:[#allocation2 + $0xf8] sm:$0xff]
      %v1702 = vadd.f32 %v1607, %v1670
      %v1703 = vadd.f32 %v1609, %v1671
      %v1704 = vadd.f32 %v1611, %v1672
      %v1705 = vadd.f32 %v1613, %v1673
      %v1706 = vadd.f32 %v1615, %v1674
      %v1707 = vadd.f32 %v1617, %v1675
      %v1708 = vadd.f32 %v1619, %v1676
      %v1709 = vadd.f32 %v1621, %v1677
      %v1710 = vadd.f32 %v1623, %v1678
      %v1711 = vadd.f32 %v1625, %v1679
      %v1712 = vadd.f32 %v1627, %v1680
      %v1713 = vadd.f32 %v1629, %v1681
      %v1714 = vadd.f32 %v1631, %v1682
      %v1715 = vadd.f32 %v1633, %v1683
      %v1716 = vadd.f32 %v1635, %v1684
      %v1717 = vadd.f32 %v1637, %v1685
      %v1718 = vadd.f32 %v1639, %v1686
      %v1719 = vadd.f32 %v1641, %v1687
      %v1720 = vadd.f32 %v1643, %v1688
      %v1721 = vadd.f32 %v1645, %v1689
      %v1722 = vadd.f32 %v1647, %v1690
      %v1723 = vadd.f32 %v1649, %v1691
      %v1724 = vadd.f32 %v1651, %v1692
      %v1725 = vadd.f32 %v1653, %v1693
      %v1726 = vadd.f32 %v1655, %v1694
      %v1727 = vadd.f32 %v1657, %v1695
      %v1728 = vadd.f32 %v1659, %v1696
      %v1729 = vadd.f32 %v1661, %v1697
      %v1730 = vadd.f32 %v1663, %v1698
      %v1731 = vadd.f32 %v1665, %v1699
      %v1732 = vadd.f32 %v1667, %v1700
      %v1733 = vadd.f32 %v1669, %v1701
      %1734 = vst.msk [vmem:[%s2] sm:$0xff] %vm1479, %v1702
      %1735 = vst.msk [vmem:[%s2 + $0x8] sm:$0xff] %vm1479, %v1703
      %1736 = vst.msk [vmem:[%s2 + $0x10] sm:$0xff] %vm1479, %v1704
      %1737 = vst.msk [vmem:[%s2 + $0x18] sm:$0xff] %vm1479, %v1705
      %1738 = vst.msk [vmem:[%s2 + $0x20] sm:$0xff] %vm1479, %v1706
      %1739 = vst.msk [vmem:[%s2 + $0x28] sm:$0xff] %vm1479, %v1707
      %1740 = vst.msk [vmem:[%s2 + $0x30] sm:$0xff] %vm1479, %v1708
      %1741 = vst.msk [vmem:[%s2 + $0x38] sm:$0xff] %vm1479, %v1709
      %1742 = vst.msk [vmem:[%s2 + $0x40] sm:$0xff] %vm1479, %v1710
      %1743 = vst.msk [vmem:[%s2 + $0x48] sm:$0xff] %vm1479, %v1711
      %1744 = vst.msk [vmem:[%s2 + $0x50] sm:$0xff] %vm1479, %v1712
      %1745 = vst.msk [vmem:[%s2 + $0x58] sm:$0xff] %vm1479, %v1713
      %1746 = vst.msk [vmem:[%s2 + $0x60] sm:$0xff] %vm1479, %v1714
      %1747 = vst.msk [vmem:[%s2 + $0x68] sm:$0xff] %vm1479, %v1715
      %1748 = vst.msk [vmem:[%s2 + $0x70] sm:$0xff] %vm1479, %v1716
      %1749 = vst.msk [vmem:[%s2 + $0x78] sm:$0xff] %vm1479, %v1717
      %1750 = vst.msk [vmem:[%s2 + $0x80] sm:$0xff] %vm1479, %v1718
      %1751 = vst.msk [vmem:[%s2 + $0x88] sm:$0xff] %vm1479, %v1719
      %1752 = vst.msk [vmem:[%s2 + $0x90] sm:$0xff] %vm1479, %v1720
      %1753 = vst.msk [vmem:[%s2 + $0x98] sm:$0xff] %vm1479, %v1721
      %1754 = vst.msk [vmem:[%s2 + $0xa0] sm:$0xff] %vm1479, %v1722
      %1755 = vst.msk [vmem:[%s2 + $0xa8] sm:$0xff] %vm1479, %v1723
      %1756 = vst.msk [vmem:[%s2 + $0xb0] sm:$0xff] %vm1479, %v1724
      %1757 = vst.msk [vmem:[%s2 + $0xb8] sm:$0xff] %vm1479, %v1725
      %1758 = vst.msk [vmem:[%s2 + $0xc0] sm:$0xff] %vm1479, %v1726
      %1759 = vst.msk [vmem:[%s2 + $0xc8] sm:$0xff] %vm1479, %v1727
      %1760 = vst.msk [vmem:[%s2 + $0xd0] sm:$0xff] %vm1479, %v1728
      %1761 = vst.msk [vmem:[%s2 + $0xd8] sm:$0xff] %vm1479, %v1729
      %1762 = vst.msk [vmem:[%s2 + $0xe0] sm:$0xff] %vm1479, %v1730
      %1763 = vst.msk [vmem:[%s2 + $0xe8] sm:$0xff] %vm1479, %v1731
      %1764 = vst.msk [vmem:[%s2 + $0xf0] sm:$0xff] %vm1479, %v1732
      %1765 = vst.msk [vmem:[%s2 + $0xf8] sm:$0xff] %vm1479, %v1733
    $region17: #{tpu_custom_call.1} parent=1 // pred_fallthru
      _
    // Predicated region
    $region18: #{tpu_custom_call.1} parent=1 // pred_check
      _
    $region19: #{tpu_custom_call.1} parent=1 // pred_check_branch
      %1767 = sbr.rel (0) target = $region21
    $region20: #{tpu_custom_call.1} parent=1 // pred_region
      _
    $region21: #{tpu_custom_call.1} parent=1 // pred_fallthru
      _
    // Predicated region
    $region22: #{tpu_custom_call.1} parent=1 // pred_check
      _
    $region23: #{tpu_custom_call.1} parent=1 // pred_check_branch
      %1769 = sbr.rel (0) target = $region25
    $region24: #{tpu_custom_call.1} parent=1 // pred_region
      %s1771 = ssub.s32 32, 32
      %1772 = vsyncadd [#allocation5], %s1771
      %s1774 = sshll.u32 [#allocation4], 4
      %s1775 = int_to_ptr.vmem [resolvable:$true] %s1774
      %1777 = dma.vmem_to_hbm [thread:$0]  %s1775, 32, %s3, [#allocation5]
    $region25: #{tpu_custom_call.1} parent=1 // pred_fallthru
      _
    // Predicated region
    $region26: #{tpu_custom_call.1} parent=1 // pred_check
      _
    $region27: #{tpu_custom_call.1} parent=1 // pred_check_branch
      %1779 = sbr.rel (0) target = $region29
    $region28: #{tpu_custom_call.1} parent=1 // pred_region
      %s1781 = ssub.s32 32, 32
      %1782 = vsyncadd [#allocation7], %s1781
      %s1784 = sshll.u32 [#allocation6], 4
      %s1785 = int_to_ptr.vmem [resolvable:$true] %s1784
      %1787 = dma.vmem_to_hbm [thread:$0]  %s1785, 32, %s4, [#allocation7]
    $region29: #{tpu_custom_call.1} parent=1 // pred_fallthru
      _
    // Predicated region
    $region30: #{tpu_custom_call.1} parent=1 // pred_check
      _
    $region31: #{tpu_custom_call.1} parent=1 // pred_check_branch
      %1789 = sbr.rel (0) target = $region33
    $region32: #{tpu_custom_call.1} parent=1 // pred_region
      _
    $region33: #{tpu_custom_call.1} parent=1 // pred_fallthru
      _
    // Predicated region
    $region34: #{tpu_custom_call.1} parent=1 // pred_check
      _
    $region35: #{tpu_custom_call.1} parent=1 // pred_check_branch
      %1791 = sbr.rel (0) target = $region37
    $region36: #{tpu_custom_call.1} parent=1 // pred_region
      %1792 = dma.done [#allocation5], 32
    $region37: #{tpu_custom_call.1} parent=1 // pred_fallthru
      _
    // Predicated region
    $region38: #{tpu_custom_call.1} parent=1 // pred_check
      _
    $region39: #{tpu_custom_call.1} parent=1 // pred_check_branch
      %1794 = sbr.rel (0) target = $region41
    $region40: #{tpu_custom_call.1} parent=1 // pred_region
      %1795 = dma.done [#allocation7], 32
    $region41: #{tpu_custom_call.1} parent=1 // pred_fallthru
      _
    %1796 = vsyncpa [#allocation5], 1
    %1797 = vsyncpa [#allocation7], 1

</llo_original>
